<compile_context>
chip_gen: v7x
topology: tpu7x:2x2x1
jax: 0.10.0
libtpu: 0.0.40
codegen_flags: <defaults>
</compile_context>

<pallas_src>
import functools

import jax
import jax.numpy as jnp
from jax.experimental import pallas as pl
from jax.experimental.pallas import tpu as pltpu


def _siamfc_kernel(z_ref, x_ref, o_ref, *, nblk, nz, hz, wz, wx, l_out,
                   out_scale):
    # z_ref: [nz, hz*wz, c]     (resident across the whole grid)
    # x_ref: [nblk, c, hx*wx]   (this grid step's batch block)
    # o_ref: [nblk, 1, l_out]   with l_out = (ho-1)*wx + wo  (lane-dense)
    for l in range(nblk):                      # static unroll, nblk is small
        zl = z_ref[l % nz]                     # [hz*wz, c]   (static index)
        xl = x_ref[l]                          # [c, hx*wx]
        # Channel contraction on the MXU, f32 accumulation.
        t = jnp.dot(zl, xl, preferred_element_type=jnp.float32)  # [hz*wz, hx*wx]
        # Fold the hz*wz spatial taps:
        #   out_flat[p] = sum_{dh,dw} t[dh*wz+dw, p + dh*wx + dw]
        # Every term is a static lane-window slice (no reshape, no big copies).
        acc = jnp.zeros((1, l_out), jnp.float32)
        for dh in range(hz):
            for dw in range(wz):
                q = dh * wz + dw
                off = dh * wx + dw
                acc = acc + t[q:q + 1, off:off + l_out]
        o_ref[l] = (acc * out_scale).astype(o_ref.dtype)


def _pick_block_batch(nx, nz, per_elem_bytes, target_elems=8,
                      vmem_cap_bytes=4 * 1024 * 1024):
    """Batch elements per grid step: a multiple of nz that divides nx.

    Capped so a single (double-buffered) x tile stays well within the scoped
    VMEM budget on all generations (v7x has only 64 MiB physical VMEM).
    """
    groups = nx // nz
    k_cap = max(1, min(max(1, target_elems // nz),
                       max(1, vmem_cap_bytes // max(1, nz * per_elem_bytes))))
    k = 1
    for d in range(1, groups + 1):
        if groups % d == 0 and d <= k_cap:
            k = d
    return nz * k


def siamfc_forward(z, x, out_scale=0.001):
    """Pallas implementation of SiamFC.forward(z, x)."""
    nz, cz, hz, wz = z.shape
    nx, c, hx, wx = x.shape
    assert cz == c and nx % nz == 0
    ho, wo = hx - hz + 1, wx - wz + 1
    l_out = (ho - 1) * wx + wo              # flat, lane-dense output length

    # Wrapper-side layout plumbing (a view for x, a tiny transpose for z):
    #   x -> [nx, c, hx*wx]   (matmul rhs: [K, N], N lane-dense)
    #   z -> [nz, hz*wz, c]   (matmul lhs: K = c lane-dense)
    x2 = x.reshape(nx, c, hx * wx)
    z2 = jnp.swapaxes(z.reshape(nz, c, hz * wz), 1, 2)

    nblk = _pick_block_batch(nx, nz, c * hx * wx * x.dtype.itemsize)
    grid = (nx // nblk,)

    kernel = functools.partial(
        _siamfc_kernel, nblk=nblk, nz=nz, hz=hz, wz=wz, wx=wx, l_out=l_out,
        out_scale=out_scale)

    out_flat = pl.pallas_call(
        kernel,
        out_shape=jax.ShapeDtypeStruct((nx, 1, l_out), x.dtype),
        grid_spec=pltpu.PrefetchScalarGridSpec(
            num_scalar_prefetch=0,
            grid=grid,
            in_specs=[
                # All exemplars: constant block index -> fetched once, resident.
                pl.BlockSpec((nz, hz * wz, c), lambda g: (0, 0, 0)),
                # Search features for this block of batch elements.
                pl.BlockSpec((nblk, c, hx * wx), lambda g: (g, 0, 0)),
            ],
            out_specs=pl.BlockSpec((nblk, 1, l_out), lambda g: (g, 0, 0)),
        ),
        compiler_params=pltpu.CompilerParams(
            dimension_semantics=("parallel",),
            # Comfortably within v7x's 64 MiB physical VMEM; the block picker
            # keeps double-buffered x tiles <= ~8 MiB.
            vmem_limit_bytes=32 * 1024 * 1024),
    )(z2, x2)

    # Un-flatten the lane-dense output: pad the tail of the last row up to a
    # full wx-wide row, reshape, crop the last dim to wo.
    out_pad = jnp.pad(out_flat, ((0, 0), (0, 0), (0, ho * wx - l_out)))
    return out_pad.reshape(nx, 1, ho, wx)[:, :, :, :wo]


def siamfc_reference(z, x, out_scale=0.001):
    """Pure-JAX reference reproducing the PyTorch grouped-conv semantics."""
    nz, c, hz, wz = z.shape
    nx, _, hx, wx = x.shape
    ho, wo = hx - hz + 1, wx - wz + 1
    zb = z[jnp.arange(nx) % nz].astype(jnp.float32)   # [nx, c, hz, wz]
    xf = x.astype(jnp.float32)
    acc = jnp.zeros((nx, ho, wo), jnp.float32)
    for dh in range(hz):
        for dw in range(wz):
            acc = acc + jnp.sum(
                xf[:, :, dh:dh + ho, dw:dw + wo]
                * zb[:, :, dh, dw][:, :, None, None],
                axis=1)
    return (acc[:, None] * out_scale).astype(x.dtype)


if __name__ == "__main__":
    key = jax.random.PRNGKey(0)

    configs = [
        # (nz, nx, c, hz, wz, hx, wx)
        (2, 16, 4, 4, 4, 16, 16),   # multi-step grid, batched block, b % nz
        (1, 3, 8, 5, 3, 17, 15),    # odd / non-aligned spatial dims
    ]
    for idx, (nz, nx, c, hz, wz, hx, wx) in enumerate(configs):
        kz, kx, key = jax.random.split(key, 3)
        z = jax.random.normal(kz, (nz, c, hz, wz), dtype=jnp.float32)
        x = jax.random.normal(kx, (nx, c, hx, wx), dtype=jnp.float32)

        out = jax.block_until_ready(siamfc_forward(z, x, out_scale=0.001))
        ref = siamfc_reference(z, x, out_scale=0.001)

        assert out.shape == (nx, 1, hx - hz + 1, wx - wz + 1), out.shape
        assert jnp.allclose(out, ref, atol=1e-5, rtol=1e-5), (
            idx, float(jnp.max(jnp.abs(out - ref))))

    print("KERNEL_OK")
</pallas_src>

<mosaic_0001>
module attributes {stable_mosaic.version = 11 : i64} {
  func.func @_siamfc_kernel(%arg0: i32, %arg1: memref<2x16x4xf32, #tpu.memory_space<vmem>>, %arg2: memref<8x4x256xf32, #tpu.memory_space<vmem>>, %arg3: memref<8x1x205xf32, #tpu.memory_space<vmem>>) attributes {dimension_semantics = [#tpu.dimension_semantics<parallel>], iteration_bounds = array<i64: 2>, scalar_prefetch = 0 : i64, scratch_operands = 0 : i64, tpu.core_type = #tpu.core_type<tc>, window_params = [{pipeline_mode = #tpu.pipeline_mode<synchronous>, transform_indices = @transform_0, window_bounds = array<i64: 2, 16, 4>}, {transform_indices = @transform_1, window_bounds = array<i64: 8, 4, 256>}, {transform_indices = @transform_2, window_bounds = array<i64: 8, 1, 205>}]} {
    %c0 = arith.constant 0 : index
    %c0_0 = arith.constant 0 : index
    %c0_1 = arith.constant 0 : index
    %0 = vector.load %arg1[%c0, %c0_0, %c0_1] : memref<2x16x4xf32, #tpu.memory_space<vmem>>, vector<1x16x4xf32>
    %1 = vector.shape_cast %0 : vector<1x16x4xf32> to vector<16x4xf32>
    %c0_2 = arith.constant 0 : index
    %c0_3 = arith.constant 0 : index
    %c0_4 = arith.constant 0 : index
    %2 = vector.load %arg2[%c0_2, %c0_3, %c0_4] : memref<8x4x256xf32, #tpu.memory_space<vmem>>, vector<1x4x256xf32>
    %3 = vector.shape_cast %2 : vector<1x4x256xf32> to vector<4x256xf32>
    %cst = arith.constant dense<0.000000e+00> : vector<16x256xf32>
    %4 = tpu.matmul %1, %3, %cst {dimension_numbers = #tpu.dot_dimension_numbers<[1], [0], [0], [1], [0, 0, 1, 1], [], []>} : vector<16x4xf32>, vector<4x256xf32>, vector<16x256xf32> -> vector<16x256xf32>
    %cst_5 = arith.constant 0.000000e+00 : f32
    %5 = vector.broadcast %cst_5 : f32 to vector<1x205xf32>
    %6 = vector.extract_strided_slice %4 {offsets = [0, 0], sizes = [1, 205], strides = [1, 1]} : vector<16x256xf32> to vector<1x205xf32>
    %7 = arith.addf %5, %6 : vector<1x205xf32>
    %8 = vector.extract_strided_slice %4 {offsets = [1, 1], sizes = [1, 205], strides = [1, 1]} : vector<16x256xf32> to vector<1x205xf32>
    %9 = arith.addf %7, %8 : vector<1x205xf32>
    %10 = vector.extract_strided_slice %4 {offsets = [2, 2], sizes = [1, 205], strides = [1, 1]} : vector<16x256xf32> to vector<1x205xf32>
    %11 = arith.addf %9, %10 : vector<1x205xf32>
    %12 = vector.extract_strided_slice %4 {offsets = [3, 3], sizes = [1, 205], strides = [1, 1]} : vector<16x256xf32> to vector<1x205xf32>
    %13 = arith.addf %11, %12 : vector<1x205xf32>
    %14 = vector.extract_strided_slice %4 {offsets = [4, 16], sizes = [1, 205], strides = [1, 1]} : vector<16x256xf32> to vector<1x205xf32>
    %15 = arith.addf %13, %14 : vector<1x205xf32>
    %16 = vector.extract_strided_slice %4 {offsets = [5, 17], sizes = [1, 205], strides = [1, 1]} : vector<16x256xf32> to vector<1x205xf32>
    %17 = arith.addf %15, %16 : vector<1x205xf32>
    %18 = vector.extract_strided_slice %4 {offsets = [6, 18], sizes = [1, 205], strides = [1, 1]} : vector<16x256xf32> to vector<1x205xf32>
    %19 = arith.addf %17, %18 : vector<1x205xf32>
    %20 = vector.extract_strided_slice %4 {offsets = [7, 19], sizes = [1, 205], strides = [1, 1]} : vector<16x256xf32> to vector<1x205xf32>
    %21 = arith.addf %19, %20 : vector<1x205xf32>
    %22 = vector.extract_strided_slice %4 {offsets = [8, 32], sizes = [1, 205], strides = [1, 1]} : vector<16x256xf32> to vector<1x205xf32>
    %23 = arith.addf %21, %22 : vector<1x205xf32>
    %24 = vector.extract_strided_slice %4 {offsets = [9, 33], sizes = [1, 205], strides = [1, 1]} : vector<16x256xf32> to vector<1x205xf32>
    %25 = arith.addf %23, %24 : vector<1x205xf32>
    %26 = vector.extract_strided_slice %4 {offsets = [10, 34], sizes = [1, 205], strides = [1, 1]} : vector<16x256xf32> to vector<1x205xf32>
    %27 = arith.addf %25, %26 : vector<1x205xf32>
    %28 = vector.extract_strided_slice %4 {offsets = [11, 35], sizes = [1, 205], strides = [1, 1]} : vector<16x256xf32> to vector<1x205xf32>
    %29 = arith.addf %27, %28 : vector<1x205xf32>
    %30 = vector.extract_strided_slice %4 {offsets = [12, 48], sizes = [1, 205], strides = [1, 1]} : vector<16x256xf32> to vector<1x205xf32>
    %31 = arith.addf %29, %30 : vector<1x205xf32>
    %32 = vector.extract_strided_slice %4 {offsets = [13, 49], sizes = [1, 205], strides = [1, 1]} : vector<16x256xf32> to vector<1x205xf32>
    %33 = arith.addf %31, %32 : vector<1x205xf32>
    %34 = vector.extract_strided_slice %4 {offsets = [14, 50], sizes = [1, 205], strides = [1, 1]} : vector<16x256xf32> to vector<1x205xf32>
    %35 = arith.addf %33, %34 : vector<1x205xf32>
    %36 = vector.extract_strided_slice %4 {offsets = [15, 51], sizes = [1, 205], strides = [1, 1]} : vector<16x256xf32> to vector<1x205xf32>
    %37 = arith.addf %35, %36 : vector<1x205xf32>
    %cst_6 = arith.constant 1.000000e-03 : f32
    %38 = vector.broadcast %cst_6 : f32 to vector<1x205xf32>
    %39 = arith.mulf %37, %38 : vector<1x205xf32>
    %c0_7 = arith.constant 0 : index
    %c0_8 = arith.constant 0 : index
    %c0_9 = arith.constant 0 : index
    %40 = vector.load %arg3[%c0_7, %c0_8, %c0_9] : memref<8x1x205xf32, #tpu.memory_space<vmem>>, vector<1x1x205xf32>
    %41 = vector.shape_cast %40 : vector<1x1x205xf32> to vector<1x205xf32>
    %42 = vector.shape_cast %39 : vector<1x205xf32> to vector<1x1x205xf32>
    tpu.vector_store %arg3[%c0_7, %c0_8, %c0_9], %42 {strides = array<i32>} : memref<8x1x205xf32, #tpu.memory_space<vmem>>, vector<1x1x205xf32>,
    %c1 = arith.constant 1 : index
    %c0_10 = arith.constant 0 : index
    %c0_11 = arith.constant 0 : index
    %43 = vector.load %arg1[%c1, %c0_10, %c0_11] : memref<2x16x4xf32, #tpu.memory_space<vmem>>, vector<1x16x4xf32>
    %44 = vector.shape_cast %43 : vector<1x16x4xf32> to vector<16x4xf32>
    %c1_12 = arith.constant 1 : index
    %c0_13 = arith.constant 0 : index
    %c0_14 = arith.constant 0 : index
    %45 = vector.load %arg2[%c1_12, %c0_13, %c0_14] : memref<8x4x256xf32, #tpu.memory_space<vmem>>, vector<1x4x256xf32>
    %46 = vector.shape_cast %45 : vector<1x4x256xf32> to vector<4x256xf32>
    %cst_15 = arith.constant dense<0.000000e+00> : vector<16x256xf32>
    %47 = tpu.matmul %44, %46, %cst_15 {dimension_numbers = #tpu.dot_dimension_numbers<[1], [0], [0], [1], [0, 0, 1, 1], [], []>} : vector<16x4xf32>, vector<4x256xf32>, vector<16x256xf32> -> vector<16x256xf32>
    %cst_16 = arith.constant 0.000000e+00 : f32
    %48 = vector.broadcast %cst_16 : f32 to vector<1x205xf32>
    %49 = vector.extract_strided_slice %47 {offsets = [0, 0], sizes = [1, 205], strides = [1, 1]} : vector<16x256xf32> to vector<1x205xf32>
    %50 = arith.addf %48, %49 : vector<1x205xf32>
    %51 = vector.extract_strided_slice %47 {offsets = [1, 1], sizes = [1, 205], strides = [1, 1]} : vector<16x256xf32> to vector<1x205xf32>
    %52 = arith.addf %50, %51 : vector<1x205xf32>
    %53 = vector.extract_strided_slice %47 {offsets = [2, 2], sizes = [1, 205], strides = [1, 1]} : vector<16x256xf32> to vector<1x205xf32>
    %54 = arith.addf %52, %53 : vector<1x205xf32>
    %55 = vector.extract_strided_slice %47 {offsets = [3, 3], sizes = [1, 205], strides = [1, 1]} : vector<16x256xf32> to vector<1x205xf32>
    %56 = arith.addf %54, %55 : vector<1x205xf32>
    %57 = vector.extract_strided_slice %47 {offsets = [4, 16], sizes = [1, 205], strides = [1, 1]} : vector<16x256xf32> to vector<1x205xf32>
    %58 = arith.addf %56, %57 : vector<1x205xf32>
    %59 = vector.extract_strided_slice %47 {offsets = [5, 17], sizes = [1, 205], strides = [1, 1]} : vector<16x256xf32> to vector<1x205xf32>
    %60 = arith.addf %58, %59 : vector<1x205xf32>
    %61 = vector.extract_strided_slice %47 {offsets = [6, 18], sizes = [1, 205], strides = [1, 1]} : vector<16x256xf32> to vector<1x205xf32>
    %62 = arith.addf %60, %61 : vector<1x205xf32>
    %63 = vector.extract_strided_slice %47 {offsets = [7, 19], sizes = [1, 205], strides = [1, 1]} : vector<16x256xf32> to vector<1x205xf32>
    %64 = arith.addf %62, %63 : vector<1x205xf32>
    %65 = vector.extract_strided_slice %47 {offsets = [8, 32], sizes = [1, 205], strides = [1, 1]} : vector<16x256xf32> to vector<1x205xf32>
    %66 = arith.addf %64, %65 : vector<1x205xf32>
    %67 = vector.extract_strided_slice %47 {offsets = [9, 33], sizes = [1, 205], strides = [1, 1]} : vector<16x256xf32> to vector<1x205xf32>
    %68 = arith.addf %66, %67 : vector<1x205xf32>
    %69 = vector.extract_strided_slice %47 {offsets = [10, 34], sizes = [1, 205], strides = [1, 1]} : vector<16x256xf32> to vector<1x205xf32>
    %70 = arith.addf %68, %69 : vector<1x205xf32>
    %71 = vector.extract_strided_slice %47 {offsets = [11, 35], sizes = [1, 205], strides = [1, 1]} : vector<16x256xf32> to vector<1x205xf32>
    %72 = arith.addf %70, %71 : vector<1x205xf32>
    %73 = vector.extract_strided_slice %47 {offsets = [12, 48], sizes = [1, 205], strides = [1, 1]} : vector<16x256xf32> to vector<1x205xf32>
    %74 = arith.addf %72, %73 : vector<1x205xf32>
    %75 = vector.extract_strided_slice %47 {offsets = [13, 49], sizes = [1, 205], strides = [1, 1]} : vector<16x256xf32> to vector<1x205xf32>
    %76 = arith.addf %74, %75 : vector<1x205xf32>
    %77 = vector.extract_strided_slice %47 {offsets = [14, 50], sizes = [1, 205], strides = [1, 1]} : vector<16x256xf32> to vector<1x205xf32>
    %78 = arith.addf %76, %77 : vector<1x205xf32>
    %79 = vector.extract_strided_slice %47 {offsets = [15, 51], sizes = [1, 205], strides = [1, 1]} : vector<16x256xf32> to vector<1x205xf32>
    %80 = arith.addf %78, %79 : vector<1x205xf32>
    %cst_17 = arith.constant 1.000000e-03 : f32
    %81 = vector.broadcast %cst_17 : f32 to vector<1x205xf32>
    %82 = arith.mulf %80, %81 : vector<1x205xf32>
    %c1_18 = arith.constant 1 : index
    %c0_19 = arith.constant 0 : index
    %c0_20 = arith.constant 0 : index
    %83 = vector.load %arg3[%c1_18, %c0_19, %c0_20] : memref<8x1x205xf32, #tpu.memory_space<vmem>>, vector<1x1x205xf32>
    %84 = vector.shape_cast %83 : vector<1x1x205xf32> to vector<1x205xf32>
    %85 = vector.shape_cast %82 : vector<1x205xf32> to vector<1x1x205xf32>
    tpu.vector_store %arg3[%c1_18, %c0_19, %c0_20], %85 {strides = array<i32>} : memref<8x1x205xf32, #tpu.memory_space<vmem>>, vector<1x1x205xf32>,
    %c0_21 = arith.constant 0 : index
    %c0_22 = arith.constant 0 : index
    %c0_23 = arith.constant 0 : index
    %86 = vector.load %arg1[%c0_21, %c0_22, %c0_23] : memref<2x16x4xf32, #tpu.memory_space<vmem>>, vector<1x16x4xf32>
    %87 = vector.shape_cast %86 : vector<1x16x4xf32> to vector<16x4xf32>
    %c2 = arith.constant 2 : index
    %c0_24 = arith.constant 0 : index
    %c0_25 = arith.constant 0 : index
    %88 = vector.load %arg2[%c2, %c0_24, %c0_25] : memref<8x4x256xf32, #tpu.memory_space<vmem>>, vector<1x4x256xf32>
    %89 = vector.shape_cast %88 : vector<1x4x256xf32> to vector<4x256xf32>
    %cst_26 = arith.constant dense<0.000000e+00> : vector<16x256xf32>
    %90 = tpu.matmul %87, %89, %cst_26 {dimension_numbers = #tpu.dot_dimension_numbers<[1], [0], [0], [1], [0, 0, 1, 1], [], []>} : vector<16x4xf32>, vector<4x256xf32>, vector<16x256xf32> -> vector<16x256xf32>
    %cst_27 = arith.constant 0.000000e+00 : f32
    %91 = vector.broadcast %cst_27 : f32 to vector<1x205xf32>
    %92 = vector.extract_strided_slice %90 {offsets = [0, 0], sizes = [1, 205], strides = [1, 1]} : vector<16x256xf32> to vector<1x205xf32>
    %93 = arith.addf %91, %92 : vector<1x205xf32>
    %94 = vector.extract_strided_slice %90 {offsets = [1, 1], sizes = [1, 205], strides = [1, 1]} : vector<16x256xf32> to vector<1x205xf32>
    %95 = arith.addf %93, %94 : vector<1x205xf32>
    %96 = vector.extract_strided_slice %90 {offsets = [2, 2], sizes = [1, 205], strides = [1, 1]} : vector<16x256xf32> to vector<1x205xf32>
    %97 = arith.addf %95, %96 : vector<1x205xf32>
    %98 = vector.extract_strided_slice %90 {offsets = [3, 3], sizes = [1, 205], strides = [1, 1]} : vector<16x256xf32> to vector<1x205xf32>
    %99 = arith.addf %97, %98 : vector<1x205xf32>
    %100 = vector.extract_strided_slice %90 {offsets = [4, 16], sizes = [1, 205], strides = [1, 1]} : vector<16x256xf32> to vector<1x205xf32>
    %101 = arith.addf %99, %100 : vector<1x205xf32>
    %102 = vector.extract_strided_slice %90 {offsets = [5, 17], sizes = [1, 205], strides = [1, 1]} : vector<16x256xf32> to vector<1x205xf32>
    %103 = arith.addf %101, %102 : vector<1x205xf32>
    %104 = vector.extract_strided_slice %90 {offsets = [6, 18], sizes = [1, 205], strides = [1, 1]} : vector<16x256xf32> to vector<1x205xf32>
    %105 = arith.addf %103, %104 : vector<1x205xf32>
    %106 = vector.extract_strided_slice %90 {offsets = [7, 19], sizes = [1, 205], strides = [1, 1]} : vector<16x256xf32> to vector<1x205xf32>
    %107 = arith.addf %105, %106 : vector<1x205xf32>
    %108 = vector.extract_strided_slice %90 {offsets = [8, 32], sizes = [1, 205], strides = [1, 1]} : vector<16x256xf32> to vector<1x205xf32>
    %109 = arith.addf %107, %108 : vector<1x205xf32>
    %110 = vector.extract_strided_slice %90 {offsets = [9, 33], sizes = [1, 205], strides = [1, 1]} : vector<16x256xf32> to vector<1x205xf32>
    %111 = arith.addf %109, %110 : vector<1x205xf32>
    %112 = vector.extract_strided_slice %90 {offsets = [10, 34], sizes = [1, 205], strides = [1, 1]} : vector<16x256xf32> to vector<1x205xf32>
    %113 = arith.addf %111, %112 : vector<1x205xf32>
    %114 = vector.extract_strided_slice %90 {offsets = [11, 35], sizes = [1, 205], strides = [1, 1]} : vector<16x256xf32> to vector<1x205xf32>
    %115 = arith.addf %113, %114 : vector<1x205xf32>
    %116 = vector.extract_strided_slice %90 {offsets = [12, 48], sizes = [1, 205], strides = [1, 1]} : vector<16x256xf32> to vector<1x205xf32>
    %117 = arith.addf %115, %116 : vector<1x205xf32>
    %118 = vector.extract_strided_slice %90 {offsets = [13, 49], sizes = [1, 205], strides = [1, 1]} : vector<16x256xf32> to vector<1x205xf32>
    %119 = arith.addf %117, %118 : vector<1x205xf32>
    %120 = vector.extract_strided_slice %90 {offsets = [14, 50], sizes = [1, 205], strides = [1, 1]} : vector<16x256xf32> to vector<1x205xf32>
    %121 = arith.addf %119, %120 : vector<1x205xf32>
    %122 = vector.extract_strided_slice %90 {offsets = [15, 51], sizes = [1, 205], strides = [1, 1]} : vector<16x256xf32> to vector<1x205xf32>
    %123 = arith.addf %121, %122 : vector<1x205xf32>
    %cst_28 = arith.constant 1.000000e-03 : f32
    %124 = vector.broadcast %cst_28 : f32 to vector<1x205xf32>
    %125 = arith.mulf %123, %124 : vector<1x205xf32>
    %c2_29 = arith.constant 2 : index
    %c0_30 = arith.constant 0 : index
    %c0_31 = arith.constant 0 : index
    %126 = vector.load %arg3[%c2_29, %c0_30, %c0_31] : memref<8x1x205xf32, #tpu.memory_space<vmem>>, vector<1x1x205xf32>
    %127 = vector.shape_cast %126 : vector<1x1x205xf32> to vector<1x205xf32>
    %128 = vector.shape_cast %125 : vector<1x205xf32> to vector<1x1x205xf32>
    tpu.vector_store %arg3[%c2_29, %c0_30, %c0_31], %128 {strides = array<i32>} : memref<8x1x205xf32, #tpu.memory_space<vmem>>, vector<1x1x205xf32>,
    %c1_32 = arith.constant 1 : index
    %c0_33 = arith.constant 0 : index
    %c0_34 = arith.constant 0 : index
    %129 = vector.load %arg1[%c1_32, %c0_33, %c0_34] : memref<2x16x4xf32, #tpu.memory_space<vmem>>, vector<1x16x4xf32>
    %130 = vector.shape_cast %129 : vector<1x16x4xf32> to vector<16x4xf32>
    %c3 = arith.constant 3 : index
    %c0_35 = arith.constant 0 : index
    %c0_36 = arith.constant 0 : index
    %131 = vector.load %arg2[%c3, %c0_35, %c0_36] : memref<8x4x256xf32, #tpu.memory_space<vmem>>, vector<1x4x256xf32>
    %132 = vector.shape_cast %131 : vector<1x4x256xf32> to vector<4x256xf32>
    %cst_37 = arith.constant dense<0.000000e+00> : vector<16x256xf32>
    %133 = tpu.matmul %130, %132, %cst_37 {dimension_numbers = #tpu.dot_dimension_numbers<[1], [0], [0], [1], [0, 0, 1, 1], [], []>} : vector<16x4xf32>, vector<4x256xf32>, vector<16x256xf32> -> vector<16x256xf32>
    %cst_38 = arith.constant 0.000000e+00 : f32
    %134 = vector.broadcast %cst_38 : f32 to vector<1x205xf32>
    %135 = vector.extract_strided_slice %133 {offsets = [0, 0], sizes = [1, 205], strides = [1, 1]} : vector<16x256xf32> to vector<1x205xf32>
    %136 = arith.addf %134, %135 : vector<1x205xf32>
    %137 = vector.extract_strided_slice %133 {offsets = [1, 1], sizes = [1, 205], strides = [1, 1]} : vector<16x256xf32> to vector<1x205xf32>
    %138 = arith.addf %136, %137 : vector<1x205xf32>
    %139 = vector.extract_strided_slice %133 {offsets = [2, 2], sizes = [1, 205], strides = [1, 1]} : vector<16x256xf32> to vector<1x205xf32>
    %140 = arith.addf %138, %139 : vector<1x205xf32>
    %141 = vector.extract_strided_slice %133 {offsets = [3, 3], sizes = [1, 205], strides = [1, 1]} : vector<16x256xf32> to vector<1x205xf32>
    %142 = arith.addf %140, %141 : vector<1x205xf32>
    %143 = vector.extract_strided_slice %133 {offsets = [4, 16], sizes = [1, 205], strides = [1, 1]} : vector<16x256xf32> to vector<1x205xf32>
    %144 = arith.addf %142, %143 : vector<1x205xf32>
    %145 = vector.extract_strided_slice %133 {offsets = [5, 17], sizes = [1, 205], strides = [1, 1]} : vector<16x256xf32> to vector<1x205xf32>
    %146 = arith.addf %144, %145 : vector<1x205xf32>
    %147 = vector.extract_strided_slice %133 {offsets = [6, 18], sizes = [1, 205], strides = [1, 1]} : vector<16x256xf32> to vector<1x205xf32>
    %148 = arith.addf %146, %147 : vector<1x205xf32>
    %149 = vector.extract_strided_slice %133 {offsets = [7, 19], sizes = [1, 205], strides = [1, 1]} : vector<16x256xf32> to vector<1x205xf32>
    %150 = arith.addf %148, %149 : vector<1x205xf32>
    %151 = vector.extract_strided_slice %133 {offsets = [8, 32], sizes = [1, 205], strides = [1, 1]} : vector<16x256xf32> to vector<1x205xf32>
    %152 = arith.addf %150, %151 : vector<1x205xf32>
    %153 = vector.extract_strided_slice %133 {offsets = [9, 33], sizes = [1, 205], strides = [1, 1]} : vector<16x256xf32> to vector<1x205xf32>
    %154 = arith.addf %152, %153 : vector<1x205xf32>
    %155 = vector.extract_strided_slice %133 {offsets = [10, 34], sizes = [1, 205], strides = [1, 1]} : vector<16x256xf32> to vector<1x205xf32>
    %156 = arith.addf %154, %155 : vector<1x205xf32>
    %157 = vector.extract_strided_slice %133 {offsets = [11, 35], sizes = [1, 205], strides = [1, 1]} : vector<16x256xf32> to vector<1x205xf32>
    %158 = arith.addf %156, %157 : vector<1x205xf32>
    %159 = vector.extract_strided_slice %133 {offsets = [12, 48], sizes = [1, 205], strides = [1, 1]} : vector<16x256xf32> to vector<1x205xf32>
    %160 = arith.addf %158, %159 : vector<1x205xf32>
    %161 = vector.extract_strided_slice %133 {offsets = [13, 49], sizes = [1, 205], strides = [1, 1]} : vector<16x256xf32> to vector<1x205xf32>
    %162 = arith.addf %160, %161 : vector<1x205xf32>
    %163 = vector.extract_strided_slice %133 {offsets = [14, 50], sizes = [1, 205], strides = [1, 1]} : vector<16x256xf32> to vector<1x205xf32>
    %164 = arith.addf %162, %163 : vector<1x205xf32>
    %165 = vector.extract_strided_slice %133 {offsets = [15, 51], sizes = [1, 205], strides = [1, 1]} : vector<16x256xf32> to vector<1x205xf32>
    %166 = arith.addf %164, %165 : vector<1x205xf32>
    %cst_39 = arith.constant 1.000000e-03 : f32
    %167 = vector.broadcast %cst_39 : f32 to vector<1x205xf32>
    %168 = arith.mulf %166, %167 : vector<1x205xf32>
    %c3_40 = arith.constant 3 : index
    %c0_41 = arith.constant 0 : index
    %c0_42 = arith.constant 0 : index
    %169 = vector.load %arg3[%c3_40, %c0_41, %c0_42] : memref<8x1x205xf32, #tpu.memory_space<vmem>>, vector<1x1x205xf32>
    %170 = vector.shape_cast %169 : vector<1x1x205xf32> to vector<1x205xf32>
    %171 = vector.shape_cast %168 : vector<1x205xf32> to vector<1x1x205xf32>
    tpu.vector_store %arg3[%c3_40, %c0_41, %c0_42], %171 {strides = array<i32>} : memref<8x1x205xf32, #tpu.memory_space<vmem>>, vector<1x1x205xf32>,
    %c0_43 = arith.constant 0 : index
    %c0_44 = arith.constant 0 : index
    %c0_45 = arith.constant 0 : index
    %172 = vector.load %arg1[%c0_43, %c0_44, %c0_45] : memref<2x16x4xf32, #tpu.memory_space<vmem>>, vector<1x16x4xf32>
    %173 = vector.shape_cast %172 : vector<1x16x4xf32> to vector<16x4xf32>
    %c4 = arith.constant 4 : index
    %c0_46 = arith.constant 0 : index
    %c0_47 = arith.constant 0 : index
    %174 = vector.load %arg2[%c4, %c0_46, %c0_47] : memref<8x4x256xf32, #tpu.memory_space<vmem>>, vector<1x4x256xf32>
    %175 = vector.shape_cast %174 : vector<1x4x256xf32> to vector<4x256xf32>
    %cst_48 = arith.constant dense<0.000000e+00> : vector<16x256xf32>
    %176 = tpu.matmul %173, %175, %cst_48 {dimension_numbers = #tpu.dot_dimension_numbers<[1], [0], [0], [1], [0, 0, 1, 1], [], []>} : vector<16x4xf32>, vector<4x256xf32>, vector<16x256xf32> -> vector<16x256xf32>
    %cst_49 = arith.constant 0.000000e+00 : f32
    %177 = vector.broadcast %cst_49 : f32 to vector<1x205xf32>
    %178 = vector.extract_strided_slice %176 {offsets = [0, 0], sizes = [1, 205], strides = [1, 1]} : vector<16x256xf32> to vector<1x205xf32>
    %179 = arith.addf %177, %178 : vector<1x205xf32>
    %180 = vector.extract_strided_slice %176 {offsets = [1, 1], sizes = [1, 205], strides = [1, 1]} : vector<16x256xf32> to vector<1x205xf32>
    %181 = arith.addf %179, %180 : vector<1x205xf32>
    %182 = vector.extract_strided_slice %176 {offsets = [2, 2], sizes = [1, 205], strides = [1, 1]} : vector<16x256xf32> to vector<1x205xf32>
    %183 = arith.addf %181, %182 : vector<1x205xf32>
    %184 = vector.extract_strided_slice %176 {offsets = [3, 3], sizes = [1, 205], strides = [1, 1]} : vector<16x256xf32> to vector<1x205xf32>
    %185 = arith.addf %183, %184 : vector<1x205xf32>
    %186 = vector.extract_strided_slice %176 {offsets = [4, 16], sizes = [1, 205], strides = [1, 1]} : vector<16x256xf32> to vector<1x205xf32>
    %187 = arith.addf %185, %186 : vector<1x205xf32>
    %188 = vector.extract_strided_slice %176 {offsets = [5, 17], sizes = [1, 205], strides = [1, 1]} : vector<16x256xf32> to vector<1x205xf32>
    %189 = arith.addf %187, %188 : vector<1x205xf32>
    %190 = vector.extract_strided_slice %176 {offsets = [6, 18], sizes = [1, 205], strides = [1, 1]} : vector<16x256xf32> to vector<1x205xf32>
    %191 = arith.addf %189, %190 : vector<1x205xf32>
    %192 = vector.extract_strided_slice %176 {offsets = [7, 19], sizes = [1, 205], strides = [1, 1]} : vector<16x256xf32> to vector<1x205xf32>
    %193 = arith.addf %191, %192 : vector<1x205xf32>
    %194 = vector.extract_strided_slice %176 {offsets = [8, 32], sizes = [1, 205], strides = [1, 1]} : vector<16x256xf32> to vector<1x205xf32>
    %195 = arith.addf %193, %194 : vector<1x205xf32>
    %196 = vector.extract_strided_slice %176 {offsets = [9, 33], sizes = [1, 205], strides = [1, 1]} : vector<16x256xf32> to vector<1x205xf32>
    %197 = arith.addf %195, %196 : vector<1x205xf32>
    %198 = vector.extract_strided_slice %176 {offsets = [10, 34], sizes = [1, 205], strides = [1, 1]} : vector<16x256xf32> to vector<1x205xf32>
    %199 = arith.addf %197, %198 : vector<1x205xf32>
    %200 = vector.extract_strided_slice %176 {offsets = [11, 35], sizes = [1, 205], strides = [1, 1]} : vector<16x256xf32> to vector<1x205xf32>
    %201 = arith.addf %199, %200 : vector<1x205xf32>
    %202 = vector.extract_strided_slice %176 {offsets = [12, 48], sizes = [1, 205], strides = [1, 1]} : vector<16x256xf32> to vector<1x205xf32>
    %203 = arith.addf %201, %202 : vector<1x205xf32>
    %204 = vector.extract_strided_slice %176 {offsets = [13, 49], sizes = [1, 205], strides = [1, 1]} : vector<16x256xf32> to vector<1x205xf32>
    %205 = arith.addf %203, %204 : vector<1x205xf32>
    %206 = vector.extract_strided_slice %176 {offsets = [14, 50], sizes = [1, 205], strides = [1, 1]} : vector<16x256xf32> to vector<1x205xf32>
    %207 = arith.addf %205, %206 : vector<1x205xf32>
    %208 = vector.extract_strided_slice %176 {offsets = [15, 51], sizes = [1, 205], strides = [1, 1]} : vector<16x256xf32> to vector<1x205xf32>
    %209 = arith.addf %207, %208 : vector<1x205xf32>
    %cst_50 = arith.constant 1.000000e-03 : f32
    %210 = vector.broadcast %cst_50 : f32 to vector<1x205xf32>
    %211 = arith.mulf %209, %210 : vector<1x205xf32>
    %c4_51 = arith.constant 4 : index
    %c0_52 = arith.constant 0 : index
    %c0_53 = arith.constant 0 : index
    %212 = vector.load %arg3[%c4_51, %c0_52, %c0_53] : memref<8x1x205xf32, #tpu.memory_space<vmem>>, vector<1x1x205xf32>
    %213 = vector.shape_cast %212 : vector<1x1x205xf32> to vector<1x205xf32>
    %214 = vector.shape_cast %211 : vector<1x205xf32> to vector<1x1x205xf32>
    tpu.vector_store %arg3[%c4_51, %c0_52, %c0_53], %214 {strides = array<i32>} : memref<8x1x205xf32, #tpu.memory_space<vmem>>, vector<1x1x205xf32>,
    %c1_54 = arith.constant 1 : index
    %c0_55 = arith.constant 0 : index
    %c0_56 = arith.constant 0 : index
    %215 = vector.load %arg1[%c1_54, %c0_55, %c0_56] : memref<2x16x4xf32, #tpu.memory_space<vmem>>, vector<1x16x4xf32>
    %216 = vector.shape_cast %215 : vector<1x16x4xf32> to vector<16x4xf32>
    %c5 = arith.constant 5 : index
    %c0_57 = arith.constant 0 : index
    %c0_58 = arith.constant 0 : index
    %217 = vector.load %arg2[%c5, %c0_57, %c0_58] : memref<8x4x256xf32, #tpu.memory_space<vmem>>, vector<1x4x256xf32>
    %218 = vector.shape_cast %217 : vector<1x4x256xf32> to vector<4x256xf32>
    %cst_59 = arith.constant dense<0.000000e+00> : vector<16x256xf32>
    %219 = tpu.matmul %216, %218, %cst_59 {dimension_numbers = #tpu.dot_dimension_numbers<[1], [0], [0], [1], [0, 0, 1, 1], [], []>} : vector<16x4xf32>, vector<4x256xf32>, vector<16x256xf32> -> vector<16x256xf32>
    %cst_60 = arith.constant 0.000000e+00 : f32
    %220 = vector.broadcast %cst_60 : f32 to vector<1x205xf32>
    %221 = vector.extract_strided_slice %219 {offsets = [0, 0], sizes = [1, 205], strides = [1, 1]} : vector<16x256xf32> to vector<1x205xf32>
    %222 = arith.addf %220, %221 : vector<1x205xf32>
    %223 = vector.extract_strided_slice %219 {offsets = [1, 1], sizes = [1, 205], strides = [1, 1]} : vector<16x256xf32> to vector<1x205xf32>
    %224 = arith.addf %222, %223 : vector<1x205xf32>
    %225 = vector.extract_strided_slice %219 {offsets = [2, 2], sizes = [1, 205], strides = [1, 1]} : vector<16x256xf32> to vector<1x205xf32>
    %226 = arith.addf %224, %225 : vector<1x205xf32>
    %227 = vector.extract_strided_slice %219 {offsets = [3, 3], sizes = [1, 205], strides = [1, 1]} : vector<16x256xf32> to vector<1x205xf32>
    %228 = arith.addf %226, %227 : vector<1x205xf32>
    %229 = vector.extract_strided_slice %219 {offsets = [4, 16], sizes = [1, 205], strides = [1, 1]} : vector<16x256xf32> to vector<1x205xf32>
    %230 = arith.addf %228, %229 : vector<1x205xf32>
    %231 = vector.extract_strided_slice %219 {offsets = [5, 17], sizes = [1, 205], strides = [1, 1]} : vector<16x256xf32> to vector<1x205xf32>
    %232 = arith.addf %230, %231 : vector<1x205xf32>
    %233 = vector.extract_strided_slice %219 {offsets = [6, 18], sizes = [1, 205], strides = [1, 1]} : vector<16x256xf32> to vector<1x205xf32>
    %234 = arith.addf %232, %233 : vector<1x205xf32>
    %235 = vector.extract_strided_slice %219 {offsets = [7, 19], sizes = [1, 205], strides = [1, 1]} : vector<16x256xf32> to vector<1x205xf32>
    %236 = arith.addf %234, %235 : vector<1x205xf32>
    %237 = vector.extract_strided_slice %219 {offsets = [8, 32], sizes = [1, 205], strides = [1, 1]} : vector<16x256xf32> to vector<1x205xf32>
    %238 = arith.addf %236, %237 : vector<1x205xf32>
    %239 = vector.extract_strided_slice %219 {offsets = [9, 33], sizes = [1, 205], strides = [1, 1]} : vector<16x256xf32> to vector<1x205xf32>
    %240 = arith.addf %238, %239 : vector<1x205xf32>
    %241 = vector.extract_strided_slice %219 {offsets = [10, 34], sizes = [1, 205], strides = [1, 1]} : vector<16x256xf32> to vector<1x205xf32>
    %242 = arith.addf %240, %241 : vector<1x205xf32>
    %243 = vector.extract_strided_slice %219 {offsets = [11, 35], sizes = [1, 205], strides = [1, 1]} : vector<16x256xf32> to vector<1x205xf32>
    %244 = arith.addf %242, %243 : vector<1x205xf32>
    %245 = vector.extract_strided_slice %219 {offsets = [12, 48], sizes = [1, 205], strides = [1, 1]} : vector<16x256xf32> to vector<1x205xf32>
    %246 = arith.addf %244, %245 : vector<1x205xf32>
    %247 = vector.extract_strided_slice %219 {offsets = [13, 49], sizes = [1, 205], strides = [1, 1]} : vector<16x256xf32> to vector<1x205xf32>
    %248 = arith.addf %246, %247 : vector<1x205xf32>
    %249 = vector.extract_strided_slice %219 {offsets = [14, 50], sizes = [1, 205], strides = [1, 1]} : vector<16x256xf32> to vector<1x205xf32>
    %250 = arith.addf %248, %249 : vector<1x205xf32>
    %251 = vector.extract_strided_slice %219 {offsets = [15, 51], sizes = [1, 205], strides = [1, 1]} : vector<16x256xf32> to vector<1x205xf32>
    %252 = arith.addf %250, %251 : vector<1x205xf32>
    %cst_61 = arith.constant 1.000000e-03 : f32
    %253 = vector.broadcast %cst_61 : f32 to vector<1x205xf32>
    %254 = arith.mulf %252, %253 : vector<1x205xf32>
    %c5_62 = arith.constant 5 : index
    %c0_63 = arith.constant 0 : index
    %c0_64 = arith.constant 0 : index
    %255 = vector.load %arg3[%c5_62, %c0_63, %c0_64] : memref<8x1x205xf32, #tpu.memory_space<vmem>>, vector<1x1x205xf32>
    %256 = vector.shape_cast %255 : vector<1x1x205xf32> to vector<1x205xf32>
    %257 = vector.shape_cast %254 : vector<1x205xf32> to vector<1x1x205xf32>
    tpu.vector_store %arg3[%c5_62, %c0_63, %c0_64], %257 {strides = array<i32>} : memref<8x1x205xf32, #tpu.memory_space<vmem>>, vector<1x1x205xf32>,
    %c0_65 = arith.constant 0 : index
    %c0_66 = arith.constant 0 : index
    %c0_67 = arith.constant 0 : index
    %258 = vector.load %arg1[%c0_65, %c0_66, %c0_67] : memref<2x16x4xf32, #tpu.memory_space<vmem>>, vector<1x16x4xf32>
    %259 = vector.shape_cast %258 : vector<1x16x4xf32> to vector<16x4xf32>
    %c6 = arith.constant 6 : index
    %c0_68 = arith.constant 0 : index
    %c0_69 = arith.constant 0 : index
    %260 = vector.load %arg2[%c6, %c0_68, %c0_69] : memref<8x4x256xf32, #tpu.memory_space<vmem>>, vector<1x4x256xf32>
    %261 = vector.shape_cast %260 : vector<1x4x256xf32> to vector<4x256xf32>
    %cst_70 = arith.constant dense<0.000000e+00> : vector<16x256xf32>
    %262 = tpu.matmul %259, %261, %cst_70 {dimension_numbers = #tpu.dot_dimension_numbers<[1], [0], [0], [1], [0, 0, 1, 1], [], []>} : vector<16x4xf32>, vector<4x256xf32>, vector<16x256xf32> -> vector<16x256xf32>
    %cst_71 = arith.constant 0.000000e+00 : f32
    %263 = vector.broadcast %cst_71 : f32 to vector<1x205xf32>
    %264 = vector.extract_strided_slice %262 {offsets = [0, 0], sizes = [1, 205], strides = [1, 1]} : vector<16x256xf32> to vector<1x205xf32>
    %265 = arith.addf %263, %264 : vector<1x205xf32>
    %266 = vector.extract_strided_slice %262 {offsets = [1, 1], sizes = [1, 205], strides = [1, 1]} : vector<16x256xf32> to vector<1x205xf32>
    %267 = arith.addf %265, %266 : vector<1x205xf32>
    %268 = vector.extract_strided_slice %262 {offsets = [2, 2], sizes = [1, 205], strides = [1, 1]} : vector<16x256xf32> to vector<1x205xf32>
    %269 = arith.addf %267, %268 : vector<1x205xf32>
    %270 = vector.extract_strided_slice %262 {offsets = [3, 3], sizes = [1, 205], strides = [1, 1]} : vector<16x256xf32> to vector<1x205xf32>
    %271 = arith.addf %269, %270 : vector<1x205xf32>
    %272 = vector.extract_strided_slice %262 {offsets = [4, 16], sizes = [1, 205], strides = [1, 1]} : vector<16x256xf32> to vector<1x205xf32>
    %273 = arith.addf %271, %272 : vector<1x205xf32>
    %274 = vector.extract_strided_slice %262 {offsets = [5, 17], sizes = [1, 205], strides = [1, 1]} : vector<16x256xf32> to vector<1x205xf32>
    %275 = arith.addf %273, %274 : vector<1x205xf32>
    %276 = vector.extract_strided_slice %262 {offsets = [6, 18], sizes = [1, 205], strides = [1, 1]} : vector<16x256xf32> to vector<1x205xf32>
    %277 = arith.addf %275, %276 : vector<1x205xf32>
    %278 = vector.extract_strided_slice %262 {offsets = [7, 19], sizes = [1, 205], strides = [1, 1]} : vector<16x256xf32> to vector<1x205xf32>
    %279 = arith.addf %277, %278 : vector<1x205xf32>
    %280 = vector.extract_strided_slice %262 {offsets = [8, 32], sizes = [1, 205], strides = [1, 1]} : vector<16x256xf32> to vector<1x205xf32>
    %281 = arith.addf %279, %280 : vector<1x205xf32>
    %282 = vector.extract_strided_slice %262 {offsets = [9, 33], sizes = [1, 205], strides = [1, 1]} : vector<16x256xf32> to vector<1x205xf32>
    %283 = arith.addf %281, %282 : vector<1x205xf32>
    %284 = vector.extract_strided_slice %262 {offsets = [10, 34], sizes = [1, 205], strides = [1, 1]} : vector<16x256xf32> to vector<1x205xf32>
    %285 = arith.addf %283, %284 : vector<1x205xf32>
    %286 = vector.extract_strided_slice %262 {offsets = [11, 35], sizes = [1, 205], strides = [1, 1]} : vector<16x256xf32> to vector<1x205xf32>
    %287 = arith.addf %285, %286 : vector<1x205xf32>
    %288 = vector.extract_strided_slice %262 {offsets = [12, 48], sizes = [1, 205], strides = [1, 1]} : vector<16x256xf32> to vector<1x205xf32>
    %289 = arith.addf %287, %288 : vector<1x205xf32>
    %290 = vector.extract_strided_slice %262 {offsets = [13, 49], sizes = [1, 205], strides = [1, 1]} : vector<16x256xf32> to vector<1x205xf32>
    %291 = arith.addf %289, %290 : vector<1x205xf32>
    %292 = vector.extract_strided_slice %262 {offsets = [14, 50], sizes = [1, 205], strides = [1, 1]} : vector<16x256xf32> to vector<1x205xf32>
    %293 = arith.addf %291, %292 : vector<1x205xf32>
    %294 = vector.extract_strided_slice %262 {offsets = [15, 51], sizes = [1, 205], strides = [1, 1]} : vector<16x256xf32> to vector<1x205xf32>
    %295 = arith.addf %293, %294 : vector<1x205xf32>
    %cst_72 = arith.constant 1.000000e-03 : f32
    %296 = vector.broadcast %cst_72 : f32 to vector<1x205xf32>
    %297 = arith.mulf %295, %296 : vector<1x205xf32>
    %c6_73 = arith.constant 6 : index
    %c0_74 = arith.constant 0 : index
    %c0_75 = arith.constant 0 : index
    %298 = vector.load %arg3[%c6_73, %c0_74, %c0_75] : memref<8x1x205xf32, #tpu.memory_space<vmem>>, vector<1x1x205xf32>
    %299 = vector.shape_cast %298 : vector<1x1x205xf32> to vector<1x205xf32>
    %300 = vector.shape_cast %297 : vector<1x205xf32> to vector<1x1x205xf32>
    tpu.vector_store %arg3[%c6_73, %c0_74, %c0_75], %300 {strides = array<i32>} : memref<8x1x205xf32, #tpu.memory_space<vmem>>, vector<1x1x205xf32>,
    %c1_76 = arith.constant 1 : index
    %c0_77 = arith.constant 0 : index
    %c0_78 = arith.constant 0 : index
    %301 = vector.load %arg1[%c1_76, %c0_77, %c0_78] : memref<2x16x4xf32, #tpu.memory_space<vmem>>, vector<1x16x4xf32>
    %302 = vector.shape_cast %301 : vector<1x16x4xf32> to vector<16x4xf32>
    %c7 = arith.constant 7 : index
    %c0_79 = arith.constant 0 : index
    %c0_80 = arith.constant 0 : index
    %303 = vector.load %arg2[%c7, %c0_79, %c0_80] : memref<8x4x256xf32, #tpu.memory_space<vmem>>, vector<1x4x256xf32>
    %304 = vector.shape_cast %303 : vector<1x4x256xf32> to vector<4x256xf32>
    %cst_81 = arith.constant dense<0.000000e+00> : vector<16x256xf32>
    %305 = tpu.matmul %302, %304, %cst_81 {dimension_numbers = #tpu.dot_dimension_numbers<[1], [0], [0], [1], [0, 0, 1, 1], [], []>} : vector<16x4xf32>, vector<4x256xf32>, vector<16x256xf32> -> vector<16x256xf32>
    %cst_82 = arith.constant 0.000000e+00 : f32
    %306 = vector.broadcast %cst_82 : f32 to vector<1x205xf32>
    %307 = vector.extract_strided_slice %305 {offsets = [0, 0], sizes = [1, 205], strides = [1, 1]} : vector<16x256xf32> to vector<1x205xf32>
    %308 = arith.addf %306, %307 : vector<1x205xf32>
    %309 = vector.extract_strided_slice %305 {offsets = [1, 1], sizes = [1, 205], strides = [1, 1]} : vector<16x256xf32> to vector<1x205xf32>
    %310 = arith.addf %308, %309 : vector<1x205xf32>
    %311 = vector.extract_strided_slice %305 {offsets = [2, 2], sizes = [1, 205], strides = [1, 1]} : vector<16x256xf32> to vector<1x205xf32>
    %312 = arith.addf %310, %311 : vector<1x205xf32>
    %313 = vector.extract_strided_slice %305 {offsets = [3, 3], sizes = [1, 205], strides = [1, 1]} : vector<16x256xf32> to vector<1x205xf32>
    %314 = arith.addf %312, %313 : vector<1x205xf32>
    %315 = vector.extract_strided_slice %305 {offsets = [4, 16], sizes = [1, 205], strides = [1, 1]} : vector<16x256xf32> to vector<1x205xf32>
    %316 = arith.addf %314, %315 : vector<1x205xf32>
    %317 = vector.extract_strided_slice %305 {offsets = [5, 17], sizes = [1, 205], strides = [1, 1]} : vector<16x256xf32> to vector<1x205xf32>
    %318 = arith.addf %316, %317 : vector<1x205xf32>
    %319 = vector.extract_strided_slice %305 {offsets = [6, 18], sizes = [1, 205], strides = [1, 1]} : vector<16x256xf32> to vector<1x205xf32>
    %320 = arith.addf %318, %319 : vector<1x205xf32>
    %321 = vector.extract_strided_slice %305 {offsets = [7, 19], sizes = [1, 205], strides = [1, 1]} : vector<16x256xf32> to vector<1x205xf32>
    %322 = arith.addf %320, %321 : vector<1x205xf32>
    %323 = vector.extract_strided_slice %305 {offsets = [8, 32], sizes = [1, 205], strides = [1, 1]} : vector<16x256xf32> to vector<1x205xf32>
    %324 = arith.addf %322, %323 : vector<1x205xf32>
    %325 = vector.extract_strided_slice %305 {offsets = [9, 33], sizes = [1, 205], strides = [1, 1]} : vector<16x256xf32> to vector<1x205xf32>
    %326 = arith.addf %324, %325 : vector<1x205xf32>
    %327 = vector.extract_strided_slice %305 {offsets = [10, 34], sizes = [1, 205], strides = [1, 1]} : vector<16x256xf32> to vector<1x205xf32>
    %328 = arith.addf %326, %327 : vector<1x205xf32>
    %329 = vector.extract_strided_slice %305 {offsets = [11, 35], sizes = [1, 205], strides = [1, 1]} : vector<16x256xf32> to vector<1x205xf32>
    %330 = arith.addf %328, %329 : vector<1x205xf32>
    %331 = vector.extract_strided_slice %305 {offsets = [12, 48], sizes = [1, 205], strides = [1, 1]} : vector<16x256xf32> to vector<1x205xf32>
    %332 = arith.addf %330, %331 : vector<1x205xf32>
    %333 = vector.extract_strided_slice %305 {offsets = [13, 49], sizes = [1, 205], strides = [1, 1]} : vector<16x256xf32> to vector<1x205xf32>
    %334 = arith.addf %332, %333 : vector<1x205xf32>
    %335 = vector.extract_strided_slice %305 {offsets = [14, 50], sizes = [1, 205], strides = [1, 1]} : vector<16x256xf32> to vector<1x205xf32>
    %336 = arith.addf %334, %335 : vector<1x205xf32>
    %337 = vector.extract_strided_slice %305 {offsets = [15, 51], sizes = [1, 205], strides = [1, 1]} : vector<16x256xf32> to vector<1x205xf32>
    %338 = arith.addf %336, %337 : vector<1x205xf32>
    %cst_83 = arith.constant 1.000000e-03 : f32
    %339 = vector.broadcast %cst_83 : f32 to vector<1x205xf32>
    %340 = arith.mulf %338, %339 : vector<1x205xf32>
    %c7_84 = arith.constant 7 : index
    %c0_85 = arith.constant 0 : index
    %c0_86 = arith.constant 0 : index
    %341 = vector.load %arg3[%c7_84, %c0_85, %c0_86] : memref<8x1x205xf32, #tpu.memory_space<vmem>>, vector<1x1x205xf32>
    %342 = vector.shape_cast %341 : vector<1x1x205xf32> to vector<1x205xf32>
    %343 = vector.shape_cast %340 : vector<1x205xf32> to vector<1x1x205xf32>
    tpu.vector_store %arg3[%c7_84, %c0_85, %c0_86], %343 {strides = array<i32>} : memref<8x1x205xf32, #tpu.memory_space<vmem>>, vector<1x1x205xf32>,
    return
  }
  func.func @transform_0(%arg0: i32) -> (i32, i32, i32) {
    %c0_i32 = arith.constant 0 : i32
    %c0_i32_0 = arith.constant 0 : i32
    %c0_i32_1 = arith.constant 0 : i32
    %c0_i32_2 = arith.constant 0 : i32
    return %c0_i32, %c0_i32_0, %c0_i32_1 : i32, i32, i32
  }
  func.func @transform_1(%arg0: i32) -> (i32, i32, i32) {
    %c0_i32 = arith.constant 0 : i32
    %c0_i32_0 = arith.constant 0 : i32
    %c0_i32_1 = arith.constant 0 : i32
    return %arg0, %c0_i32, %c0_i32_0 : i32, i32, i32
  }
  func.func @transform_2(%arg0: i32) -> (i32, i32, i32) {
    %c0_i32 = arith.constant 0 : i32
    %c0_i32_0 = arith.constant 0 : i32
    %c0_i32_1 = arith.constant 0 : i32
    return %arg0, %c0_i32, %c0_i32_0 : i32, i32, i32
  }
}

</mosaic_0001>

<llo_original>
// kernel: tpu_custom_call.1
$region0: #{tpu_custom_call.1}
  #allocation0 [shape = 'u32[]', space=smem, size = 0x4, offset = 0x4, fixed_abs, tag = 'smem constant byte address 0x4 - core index']
  #allocation1 [shape = 'u32[144,128]{1,0:T(1,128)}', space=vmem, size = 0x12000, scoped, tag = 'internal scratch']
  %s0 = inlined_call_operand.vmem [shape: f32[2,16,4], index: 0, kind: input, shape index: {}]
  %s1 = inlined_call_operand.hbm [shape: f32[16,4,256], index: 1, kind: input, shape index: {}]
  %s2 = inlined_call_operand.hbm [shape: f32[16,1,205], index: 2, kind: output, shape index: {}]
  %s3 = sld [smem:[#allocation0]]
  $region45: #{tpu_custom_call.1} parent=0
    _
  %s5 = ssub.s32 1, %s3
  %s6 = scalar_select 0, %s5, %s3
  $region1: #{tpu_custom_call.1} parent=0
    #allocation2 [shape = 'u8[65536]{0}', space=vmem, size = 0x10000, scoped, tag = 'input window, operand 1']
    #allocation3 [shape = 's32[2]{0}', space=sflag, size = 0x8, scoped, tag = 'scoped memory for tpu_custom_call.1']
    #allocation4 [shape = 's32[2]{0}', space=sflag, size = 0x8, scoped, tag = 'scoped memory for tpu_custom_call.1']
    #allocation5 [shape = 'u8[16384]{0}', space=vmem, size = 0x4000, scoped, tag = 'output window, operand 0']
    %7 = vsyncpa [#allocation3], 0
    %s8 = scalar_lea.sflag [#allocation3], 1
    %9 = vsyncpa %s8, 0
    %10 = vsyncpa [#allocation4], 0
    %s11 = scalar_lea.sflag [#allocation4], 1
    %12 = vsyncpa %s11, 0
    loop: start=0, step=1, limit=4
    $region2: #{tpu_custom_call.1} parent=1 // loop_pre_header
      _
    $region3: #{tpu_custom_call.1} parent=1 // loop_header
      %s14 = sphi 0, %s18
      %p15 = scmp.ge.s32.totalorder %s14, 4
      %s22 = sphi 0, %s22
      %s24 = sphi 0, %s22
      %s25 = sphi 0, %s24
      %s39 = sphi 0, %s25
      %s45 = sphi 0, %s47
      %s48 = sphi 0, %s45
      %s49 = sphi 0, %s48
      %s65 = sphi 0, %s49
      %s71 = sphi 0, %s73
      %s74 = sphi 0, %s71
      %s75 = sphi 0, %s74
      %s91 = sphi 0, %s75
    $region4: #{tpu_custom_call.1} parent=1 // loop_header_branch
      %17 = sbr.rel (%p15) target = $region8
    $region5: #{tpu_custom_call.1} parent=1 // loop_body
      %s19 = ssub.s32 %s14, 1
      %s20 = ssub.s32 %s14, 2
      %s21 = sadd.s32 %s14, 1
      %s23 = sadd.s32 %s22, 1
      %p26 = scmp.eq.s32.totalorder %s14, 1
      %p27 = scmp.ne.s32.totalorder %s22, %s24
      %p28 = scmp.eq.s32.totalorder %s14, 0
      %p29 = por %p27, %p28
      %p30 = scmp.ne.s32.totalorder %s22, %s24
      %p31 = scmp.eq.s32.totalorder %s19, 1
      %p32 = por %p30, %p31
      %p33 = scmp.ne.s32.totalorder %s24, %s25
      %p34 = scmp.eq.s32.totalorder %s19, 0
      %p35 = por %p33, %p34
      %p36 = scmp.ne.s32.totalorder %s24, %s25
      %p37 = scmp.eq.s32.totalorder %s20, 1
      %p38 = por %p36, %p37
      %p40 = scmp.ne.s32.totalorder %s25, %s39
      %p41 = scmp.eq.s32.totalorder %s20, 0
      %p42 = por %p40, %p41
      %s43 = ssub.s32 %s14, %s21
      %p44 = scmp.eq.s32.totalorder %s43, 0
      %s46 = sadd.s32 %s45, 1
      %s47 = scalar_select %p44, %s45, %s46
      %p50 = pneg %p44
      %p51 = scmp.eq.s32.totalorder %s14, 1
      %p52 = por %p50, %p51
      %p53 = scmp.ne.s32.totalorder %s45, %s48
      %p54 = scmp.eq.s32.totalorder %s14, 0
      %p55 = por %p53, %p54
      %p56 = scmp.ne.s32.totalorder %s45, %s48
      %p57 = scmp.eq.s32.totalorder %s19, 1
      %p58 = por %p56, %p57
      %p59 = scmp.ne.s32.totalorder %s48, %s49
      %p60 = scmp.eq.s32.totalorder %s19, 0
      %p61 = por %p59, %p60
      %p62 = scmp.ne.s32.totalorder %s48, %s49
      %p63 = scmp.eq.s32.totalorder %s20, 1
      %p64 = por %p62, %p63
      %p66 = scmp.ne.s32.totalorder %s49, %s65
      %p67 = scmp.eq.s32.totalorder %s20, 0
      %p68 = por %p66, %p67
      %s69 = ssub.s32 %s14, %s21
      %p70 = scmp.eq.s32.totalorder %s69, 0
      %s72 = sadd.s32 %s71, 1
      %s73 = scalar_select %p70, %s71, %s72
      %p76 = pneg %p70
      %p77 = scmp.eq.s32.totalorder %s14, 1
      %p78 = por %p76, %p77
      %p79 = scmp.ne.s32.totalorder %s71, %s74
      %p80 = scmp.eq.s32.totalorder %s14, 0
      %p81 = por %p79, %p80
      %p82 = scmp.ne.s32.totalorder %s71, %s74
      %p83 = scmp.eq.s32.totalorder %s19, 1
      %p84 = por %p82, %p83
      %p85 = scmp.ne.s32.totalorder %s74, %s75
      %p86 = scmp.eq.s32.totalorder %s19, 0
      %p87 = por %p85, %p86
      %p88 = scmp.ne.s32.totalorder %s74, %s75
      %p89 = scmp.eq.s32.totalorder %s20, 1
      %p90 = por %p88, %p89
      %p92 = scmp.ne.s32.totalorder %s75, %s91
      %p93 = scmp.eq.s32.totalorder %s20, 0
      %p94 = por %p92, %p93
      %p95 = scmp.le.s32.totalorder 1, %s14
      %p96 = scmp.lt.s32.totalorder %s14, 3
      %p97 = pnand %p95, %p96
      %p98 = pneg %p97
      // Predicated region
      $region9: #{tpu_custom_call.1} parent=5 // pred_check
        _
      $region10: #{tpu_custom_call.1} parent=5 // pred_check_branch
        %100 = sbr.rel (%p97) target = $region12
      $region11: #{tpu_custom_call.1} parent=5 // pred_region
        %s101 = ssub.s32 %s14, 1
        // Predicated region
        $region13: #{tpu_custom_call.1} parent=11 // pred_check
          %p102 = pneg %p35
        $region14: #{tpu_custom_call.1} parent=11 // pred_check_branch
          %104 = sbr.rel (%p102) target = $region16
        $region15: #{tpu_custom_call.1} parent=11 // pred_region
          _
        $region16: #{tpu_custom_call.1} parent=11 // pred_fallthru
          _
      $region12: #{tpu_custom_call.1} parent=5 // pred_fallthru
        _
      %p105 = scmp.lt.s32.totalorder %s14, 2
      // Predicated region
      $region17: #{tpu_custom_call.1} parent=5 // pred_check
        %p106 = pneg %p105
      $region18: #{tpu_custom_call.1} parent=5 // pred_check_branch
        %108 = sbr.rel (%p106) target = $region20
      $region19: #{tpu_custom_call.1} parent=5 // pred_region
        // Predicated region
        $region21: #{tpu_custom_call.1} parent=19 // pred_check
          %p109 = pneg %p55
        $region22: #{tpu_custom_call.1} parent=19 // pred_check_branch
          %111 = sbr.rel (%p109) target = $region24
        $region23: #{tpu_custom_call.1} parent=19 // pred_region
          %s112 = sand.u32 %s45, 1
          %s113 = scalar_lea.sflag [#allocation3], %s112
          %s114 = sand.u32 %s45, 1
          %s115 = smul.addr %s114, 64
          %s116 = scalar_lea.vmem [#allocation2], %s115
          %s117 = smul.u32 8, %s14
          %s119 = ssub.s32 1024, 1024
          %120 = vsyncadd %s113, %s119
          %s121 = smul.addr %s117, 2
          %s122 = smul.addr %s121, 64
          %s123 = scalar_lea.hbm %s1, %s122
          %s124 = sshll.u32 %s116, 4
          %s125 = int_to_ptr.vmem [resolvable:$true] %s124
          %130 = dma.hbm_to_vmem [thread:$0]  %s123, 1024, %s125, %s113, 128, 128, 8
        $region24: #{tpu_custom_call.1} parent=19 // pred_fallthru
          _
      $region20: #{tpu_custom_call.1} parent=5 // pred_fallthru
        _
      %p131 = scmp.le.s32.totalorder 1, %s14
      %p132 = scmp.lt.s32.totalorder %s14, 3
      %p133 = pnand %p131, %p132
      %p134 = pneg %p133
      // Predicated region
      $region25: #{tpu_custom_call.1} parent=5 // pred_check
        _
      $region26: #{tpu_custom_call.1} parent=5 // pred_check_branch
        %136 = sbr.rel (%p133) target = $region28
      $region27: #{tpu_custom_call.1} parent=5 // pred_region
        %s137 = ssub.s32 %s14, 1
        %s138 = sand.u32 %s48, 1
        %s139 = scalar_lea.sflag [#allocation3], %s138
        %s140 = sand.u32 %s48, 1
        %s141 = smul.addr %s140, 64
        %s142 = scalar_lea.vmem [#allocation2], %s141
        // Predicated region
        $region29: #{tpu_custom_call.1} parent=27 // pred_check
          %p143 = pneg %p61
        $region30: #{tpu_custom_call.1} parent=27 // pred_check_branch
          %145 = sbr.rel (%p143) target = $region32
        $region31: #{tpu_custom_call.1} parent=27 // pred_region
          %146 = dma.done %s139, 1024
        $region32: #{tpu_custom_call.1} parent=27 // pred_fallthru
          _
        %p147 = pneg %p35
        %p148 = pneg %p32
        %s149 = sand.u32 %s48, 1
        %s150 = scalar_lea.sflag [#allocation3], %s149
        %s151 = sand.u32 %s48, 1
        %s152 = smul.addr %s151, 64
        %s153 = scalar_lea.vmem [#allocation2], %s152
        %p154 = pneg %p61
        %p155 = pneg %p58
        %p156 = pneg %p87
        %p157 = pneg %p84
        %s158 = sand.u32 %s74, 1
        %s159 = scalar_lea.sflag [#allocation4], %s158
        %s160 = sand.u32 %s74, 1
        %s161 = smul.addr %s160, 16
        %s162 = scalar_lea.vmem [#allocation5], %s161
        %s163 = smul.u32 8, %s19
        %s164 = smul.u32 8, %s19
        %v165 = vld [vmem:[%s0] sm:$0xff]
        %v166 = vld [vmem:[%s0 + $0x8] sm:$0xff]
        %v167 = vld [vmem:[%s142] sm:$0xff]
        %v169 = vcombine.high %v167, %v167
        %vm170 = vcmask 31744
        %v172 = vsel %vm170, %v165, 0
        %v175 = vsel %vm170, %v166, 0
        %vm177 = vcmask 1043456
        %v178 = vsel %vm177, %v167, 0
        %v180 = vsel %vm177, %v169, 0
        %182 = vmatprep.subr.mxu0 %v180
        %183 = vmatpush1.msra.mxu0 %v178
        %184 = vmatprep.subr.mxu0 0.0
        %185 = vmatpush1.msra.mxu0 0.0
        %186 = vmatprep.subr.mxu0 0.0
        %187 = vmatpush1.msra.mxu0 0.0
        %188 = vmatprep.subr.mxu0 0.0
        %189 = vmatpush1.msra.mxu0 0.0
        %190 = vmatprep.subr.mxu0 0.0
        %191 = vmatpush1.msra.mxu0 0.0
        %192 = vmatprep.subr.mxu0 0.0
        %193 = vmatpush1.msra.mxu0 0.0
        %194 = vmatprep.subr.mxu0 0.0
        %195 = vmatpush1.msra.mxu0 0.0
        %196 = vmatprep.subr.mxu0 0.0
        %197 = vmatpush1.msra.mxu0 0.0
        %198 = vmatprep.subr.mxu0 0.0
        %199 = vmatpush1.msra.mxu0 0.0
        %200 = vmatprep.subr.mxu0 0.0
        %201 = vmatpush1.msra.mxu0 0.0
        %202 = vmatprep.subr.mxu0 0.0
        %203 = vmatpush1.msra.mxu0 0.0
        %204 = vmatprep.subr.mxu0 0.0
        %205 = vmatpush1.msra.mxu0 0.0
        %206 = vmatprep.subr.mxu0 0.0
        %207 = vmatpush1.msra.mxu0 0.0
        %208 = vmatprep.subr.mxu0 0.0
        %209 = vmatpush1.msra.mxu0 0.0
        %210 = vmatprep.subr.mxu0 0.0
        %211 = vmatpush1.msra.mxu0 0.0
        %212 = vmatprep.subr.mxu0 0.0
        %213 = vmatpush1.msra.mxu0 0.0
        %214 = vmatprep.subr.mxu0 0.0
        %215 = vmatpush1.msra.mxu0 0.0
        %216 = vmatprep.subr.mxu0 0.0
        %217 = vmatpush1.msra.mxu0 0.0
        %218 = vmatprep.subr.mxu0 0.0
        %219 = vmatpush1.msra.mxu0 0.0
        %220 = vmatprep.subr.mxu0 0.0
        %221 = vmatpush1.msra.mxu0 0.0
        %222 = vmatprep.subr.mxu0 0.0
        %223 = vmatpush1.msra.mxu0 0.0
        %224 = vmatprep.subr.mxu0 0.0
        %225 = vmatpush1.msra.mxu0 0.0
        %226 = vmatprep.subr.mxu0 0.0
        %227 = vmatpush1.msra.mxu0 0.0
        %228 = vmatprep.subr.mxu0 0.0
        %229 = vmatpush1.msra.mxu0 0.0
        %230 = vmatprep.subr.mxu0 0.0
        %231 = vmatpush1.msra.mxu0 0.0
        %232 = vmatprep.subr.mxu0 0.0
        %233 = vmatpush1.msra.mxu0 0.0
        %234 = vmatprep.subr.mxu0 0.0
        %235 = vmatpush1.msra.mxu0 0.0
        %236 = vmatprep.subr.mxu0 0.0
        %237 = vmatpush1.msra.mxu0 0.0
        %238 = vmatprep.subr.mxu0 0.0
        %239 = vmatpush1.msra.mxu0 0.0
        %240 = vmatprep.subr.mxu0 0.0
        %241 = vmatpush1.msra.mxu0 0.0
        %242 = vmatprep.subr.mxu0 0.0
        %243 = vmatpush1.msra.mxu0 0.0
        %244 = vmatprep.subr.mxu0 0.0
        %245 = vmatpush1.msra.mxu0 0.0
        %246 = vmatprep.mubr.f32.mxu0 0.0
        %247 = vmatmul.mubr.f32.gmra.mrb[0].mxu0 %v172
        %v248 = vpop.f32.mrb[0].mxu0
        %v249 = vadd.f32 0.0, %v248
        %v250 = vpop.f32.mrb[0].mxu0
        %v251 = vadd.f32 0.0, %v250
        %252 = vmatprep.mubr.f32.mxu0 0.0
        %253 = vmatmul.mubr.f32.gmra.mrb[0].mxu0 %v175
        %v254 = vpop.f32.mrb[0].mxu0
        %v255 = vadd.f32 0.0, %v254
        %v256 = vpop.f32.mrb[0].mxu0
        %v257 = vadd.f32 0.0, %v256
        %258 = vdwg.mxu0
        %v259 = vadd.f32 %v249, 0.0
        %v260 = vadd.f32 %v251, 0.0
        %v263 = vrot.slane %v249, 1
        %v264 = vrot.slane %v251, 1
        %265 = vrot.lane.b32.xlu0 %v263, 127
        %v266 = vpop.permute.xlu0 %265
        %267 = vrot.lane.b32.xlu0 %v264, 127
        %v268 = vpop.permute.xlu0 %267
        %vm269 = vcmask 1039360
        %v270 = vsel %vm269, %v266, %v268
        %v273 = vadd.f32 %v259, %v270
        %v274 = vadd.f32 %v260, %v268
        %v275 = vrot.slane %v249, 2
        %v276 = vrot.slane %v251, 2
        %277 = vrot.lane.b32.xlu0 %v275, 126
        %v278 = vpop.permute.xlu0 %277
        %279 = vrot.lane.b32.xlu0 %v276, 126
        %v280 = vpop.permute.xlu0 %279
        %vm281 = vcmask 1031168
        %v282 = vsel %vm281, %v278, %v280
        %v285 = vadd.f32 %v273, %v282
        %v286 = vadd.f32 %v274, %v280
        %v287 = vrot.slane %v249, 3
        %v288 = vrot.slane %v251, 3
        %289 = vrot.lane.b32.xlu0 %v287, 125
        %v290 = vpop.permute.xlu0 %289
        %291 = vrot.lane.b32.xlu0 %v288, 125
        %v292 = vpop.permute.xlu0 %291
        %vm293 = vcmask 1022976
        %v294 = vsel %vm293, %v290, %v292
        %v297 = vadd.f32 %v285, %v294
        %v298 = vadd.f32 %v286, %v292
        %v299 = vrot.slane %v249, 4
        %v300 = vrot.slane %v251, 4
        %301 = vrot.lane.b32.xlu0 %v299, 112
        %v302 = vpop.permute.xlu0 %301
        %303 = vrot.lane.b32.xlu0 %v300, 112
        %v304 = vpop.permute.xlu0 %303
        %vm305 = vcmask 916480
        %v306 = vsel %vm305, %v302, %v304
        %v309 = vadd.f32 %v297, %v306
        %v310 = vadd.f32 %v298, %v304
        %v311 = vrot.slane %v249, 5
        %v312 = vrot.slane %v251, 5
        %313 = vrot.lane.b32.xlu0 %v311, 111
        %v314 = vpop.permute.xlu0 %313
        %315 = vrot.lane.b32.xlu0 %v312, 111
        %v316 = vpop.permute.xlu0 %315
        %vm317 = vcmask 908288
        %v318 = vsel %vm317, %v314, %v316
        %v321 = vadd.f32 %v309, %v318
        %v322 = vadd.f32 %v310, %v316
        %v323 = vrot.slane %v249, 6
        %v324 = vrot.slane %v251, 6
        %325 = vrot.lane.b32.xlu0 %v323, 110
        %v326 = vpop.permute.xlu0 %325
        %327 = vrot.lane.b32.xlu0 %v324, 110
        %v328 = vpop.permute.xlu0 %327
        %vm329 = vcmask 900096
        %v330 = vsel %vm329, %v326, %v328
        %v333 = vadd.f32 %v321, %v330
        %v334 = vadd.f32 %v322, %v328
        %v335 = vrot.slane %v249, 7
        %v336 = vrot.slane %v251, 7
        %337 = vrot.lane.b32.xlu0 %v335, 109
        %v338 = vpop.permute.xlu0 %337
        %339 = vrot.lane.b32.xlu0 %v336, 109
        %v340 = vpop.permute.xlu0 %339
        %vm341 = vcmask 891904
        %v342 = vsel %vm341, %v338, %v340
        %v345 = vadd.f32 %v333, %v342
        %v346 = vadd.f32 %v334, %v340
        %349 = vrot.lane.b32.xlu0 %v255, 96
        %v350 = vpop.permute.xlu0 %349
        %351 = vrot.lane.b32.xlu0 %v257, 96
        %v352 = vpop.permute.xlu0 %351
        %vm353 = vcmask 785408
        %v354 = vsel %vm353, %v350, %v352
        %v357 = vadd.f32 %v345, %v354
        %v358 = vadd.f32 %v346, %v352
        %v359 = vrot.slane %v255, 1
        %v360 = vrot.slane %v257, 1
        %361 = vrot.lane.b32.xlu0 %v359, 95
        %v362 = vpop.permute.xlu0 %361
        %363 = vrot.lane.b32.xlu0 %v360, 95
        %v364 = vpop.permute.xlu0 %363
        %vm365 = vcmask 777216
        %v366 = vsel %vm365, %v362, %v364
        %v369 = vadd.f32 %v357, %v366
        %v370 = vadd.f32 %v358, %v364
        %v371 = vrot.slane %v255, 2
        %v372 = vrot.slane %v257, 2
        %373 = vrot.lane.b32.xlu0 %v371, 94
        %v374 = vpop.permute.xlu0 %373
        %375 = vrot.lane.b32.xlu0 %v372, 94
        %v376 = vpop.permute.xlu0 %375
        %vm377 = vcmask 769024
        %v378 = vsel %vm377, %v374, %v376
        %v381 = vadd.f32 %v369, %v378
        %v382 = vadd.f32 %v370, %v376
        %v383 = vrot.slane %v255, 3
        %v384 = vrot.slane %v257, 3
        %385 = vrot.lane.b32.xlu0 %v383, 93
        %v386 = vpop.permute.xlu0 %385
        %387 = vrot.lane.b32.xlu0 %v384, 93
        %v388 = vpop.permute.xlu0 %387
        %vm389 = vcmask 760832
        %v390 = vsel %vm389, %v386, %v388
        %v393 = vadd.f32 %v381, %v390
        %v394 = vadd.f32 %v382, %v388
        %v395 = vrot.slane %v255, 4
        %v396 = vrot.slane %v257, 4
        %397 = vrot.lane.b32.xlu0 %v395, 80
        %v398 = vpop.permute.xlu0 %397
        %399 = vrot.lane.b32.xlu0 %v396, 80
        %v400 = vpop.permute.xlu0 %399
        %vm401 = vcmask 654336
        %v402 = vsel %vm401, %v398, %v400
        %v405 = vadd.f32 %v393, %v402
        %v406 = vadd.f32 %v394, %v400
        %v407 = vrot.slane %v255, 5
        %v408 = vrot.slane %v257, 5
        %409 = vrot.lane.b32.xlu0 %v407, 79
        %v410 = vpop.permute.xlu0 %409
        %411 = vrot.lane.b32.xlu0 %v408, 79
        %v412 = vpop.permute.xlu0 %411
        %vm413 = vcmask 646144
        %v414 = vsel %vm413, %v410, %v412
        %v417 = vadd.f32 %v405, %v414
        %v418 = vadd.f32 %v406, %v412
        %v419 = vrot.slane %v255, 6
        %v420 = vrot.slane %v257, 6
        %421 = vrot.lane.b32.xlu0 %v419, 78
        %v422 = vpop.permute.xlu0 %421
        %423 = vrot.lane.b32.xlu0 %v420, 78
        %v424 = vpop.permute.xlu0 %423
        %vm425 = vcmask 637952
        %v426 = vsel %vm425, %v422, %v424
        %v429 = vadd.f32 %v417, %v426
        %v430 = vadd.f32 %v418, %v424
        %v431 = vrot.slane %v255, 7
        %v432 = vrot.slane %v257, 7
        %433 = vrot.lane.b32.xlu0 %v431, 77
        %v434 = vpop.permute.xlu0 %433
        %435 = vrot.lane.b32.xlu0 %v432, 77
        %v436 = vpop.permute.xlu0 %435
        %vm437 = vcmask 629760
        %v438 = vsel %vm437, %v434, %v436
        %v441 = vadd.f32 %v429, %v438
        %v442 = vadd.f32 %v430, %v436
        %v443 = vmul.f32 %v441, 0.001
        %v444 = vmul.f32 %v442, 0.001
        %v447 = vcombine.low %v443, %v444
        %v449 = vunpack.c.l.s4 1966171168
        %v450 = vunpack.c.0.s8 %v449
        %v451 = vlaneseq
        %v452 = vshrl.u32 %v451, 7
        %v453 = vsub.s32 %v450, %v452
        %v454 = vrot.slane %v447, %v453
        %v456 = vunpack.c.l.s4 1966171168
        %v457 = vunpack.c.0.s8 %v456
        %v458 = vlaneseq
        %v459 = vshrl.u32 %v458, 7
        %v460 = vsub.s32 %v457, %v459
        %v461 = vrot.slane %v454, %v460
        %v463 = vlaneseq
        %vm464 = vcmp.ge.s32.totalorder %v463, 0
        %vm465 = vcmp.lt.s32.totalorder %v463, 205
        %vm466 = vmand %vm464, %vm465
        %467 = vst.msk [vmem:[%s162] sm:$0x3] %vm466, %v461
        %s468 = scalar_lea.vmem %s0, 16
        %v469 = vld [vmem:[%s468] sm:$0xff]
        %v470 = vld [vmem:[%s468 + $0x8] sm:$0xff]
        %s471 = scalar_lea.vmem %s142, 8 [#allocation2]
        %v472 = vld [vmem:[%s471] sm:$0xff]
        %v474 = vcombine.high %v472, %v472
        %v476 = vsel %vm170, %v469, 0
        %v479 = vsel %vm170, %v470, 0
        %v481 = vsel %vm177, %v472, 0
        %v483 = vsel %vm177, %v474, 0
        %485 = vmatprep.subr.mxu0 %v483
        %486 = vmatpush1.msra.mxu0 %v481
        %487 = vmatprep.subr.mxu0 0.0
        %488 = vmatpush1.msra.mxu0 0.0
        %489 = vmatprep.subr.mxu0 0.0
        %490 = vmatpush1.msra.mxu0 0.0
        %491 = vmatprep.subr.mxu0 0.0
        %492 = vmatpush1.msra.mxu0 0.0
        %493 = vmatprep.subr.mxu0 0.0
        %494 = vmatpush1.msra.mxu0 0.0
        %495 = vmatprep.subr.mxu0 0.0
        %496 = vmatpush1.msra.mxu0 0.0
        %497 = vmatprep.subr.mxu0 0.0
        %498 = vmatpush1.msra.mxu0 0.0
        %499 = vmatprep.subr.mxu0 0.0
        %500 = vmatpush1.msra.mxu0 0.0
        %501 = vmatprep.subr.mxu0 0.0
        %502 = vmatpush1.msra.mxu0 0.0
        %503 = vmatprep.subr.mxu0 0.0
        %504 = vmatpush1.msra.mxu0 0.0
        %505 = vmatprep.subr.mxu0 0.0
        %506 = vmatpush1.msra.mxu0 0.0
        %507 = vmatprep.subr.mxu0 0.0
        %508 = vmatpush1.msra.mxu0 0.0
        %509 = vmatprep.subr.mxu0 0.0
        %510 = vmatpush1.msra.mxu0 0.0
        %511 = vmatprep.subr.mxu0 0.0
        %512 = vmatpush1.msra.mxu0 0.0
        %513 = vmatprep.subr.mxu0 0.0
        %514 = vmatpush1.msra.mxu0 0.0
        %515 = vmatprep.subr.mxu0 0.0
        %516 = vmatpush1.msra.mxu0 0.0
        %517 = vmatprep.subr.mxu0 0.0
        %518 = vmatpush1.msra.mxu0 0.0
        %519 = vmatprep.subr.mxu0 0.0
        %520 = vmatpush1.msra.mxu0 0.0
        %521 = vmatprep.subr.mxu0 0.0
        %522 = vmatpush1.msra.mxu0 0.0
        %523 = vmatprep.subr.mxu0 0.0
        %524 = vmatpush1.msra.mxu0 0.0
        %525 = vmatprep.subr.mxu0 0.0
        %526 = vmatpush1.msra.mxu0 0.0
        %527 = vmatprep.subr.mxu0 0.0
        %528 = vmatpush1.msra.mxu0 0.0
        %529 = vmatprep.subr.mxu0 0.0
        %530 = vmatpush1.msra.mxu0 0.0
        %531 = vmatprep.subr.mxu0 0.0
        %532 = vmatpush1.msra.mxu0 0.0
        %533 = vmatprep.subr.mxu0 0.0
        %534 = vmatpush1.msra.mxu0 0.0
        %535 = vmatprep.subr.mxu0 0.0
        %536 = vmatpush1.msra.mxu0 0.0
        %537 = vmatprep.subr.mxu0 0.0
        %538 = vmatpush1.msra.mxu0 0.0
        %539 = vmatprep.subr.mxu0 0.0
        %540 = vmatpush1.msra.mxu0 0.0
        %541 = vmatprep.subr.mxu0 0.0
        %542 = vmatpush1.msra.mxu0 0.0
        %543 = vmatprep.subr.mxu0 0.0
        %544 = vmatpush1.msra.mxu0 0.0
        %545 = vmatprep.subr.mxu0 0.0
        %546 = vmatpush1.msra.mxu0 0.0
        %547 = vmatprep.subr.mxu0 0.0
        %548 = vmatpush1.msra.mxu0 0.0
        %549 = vmatprep.mubr.f32.mxu0 0.0
        %550 = vmatmul.mubr.f32.gmra.mrb[0].mxu0 %v476
        %v551 = vpop.f32.mrb[0].mxu0
        %v552 = vadd.f32 0.0, %v551
        %v553 = vpop.f32.mrb[0].mxu0
        %v554 = vadd.f32 0.0, %v553
        %555 = vmatprep.mubr.f32.mxu0 0.0
        %556 = vmatmul.mubr.f32.gmra.mrb[0].mxu0 %v479
        %v557 = vpop.f32.mrb[0].mxu0
        %v558 = vadd.f32 0.0, %v557
        %v559 = vpop.f32.mrb[0].mxu0
        %v560 = vadd.f32 0.0, %v559
        %561 = vdwg.mxu0
        %v562 = vadd.f32 %v552, 0.0
        %v563 = vadd.f32 %v554, 0.0
        %v566 = vrot.slane %v552, 1
        %v567 = vrot.slane %v554, 1
        %568 = vrot.lane.b32.xlu0 %v566, 127
        %v569 = vpop.permute.xlu0 %568
        %570 = vrot.lane.b32.xlu0 %v567, 127
        %v571 = vpop.permute.xlu0 %570
        %v572 = vsel %vm269, %v569, %v571
        %v575 = vadd.f32 %v562, %v572
        %v576 = vadd.f32 %v563, %v571
        %v577 = vrot.slane %v552, 2
        %v578 = vrot.slane %v554, 2
        %579 = vrot.lane.b32.xlu0 %v577, 126
        %v580 = vpop.permute.xlu0 %579
        %581 = vrot.lane.b32.xlu0 %v578, 126
        %v582 = vpop.permute.xlu0 %581
        %v583 = vsel %vm281, %v580, %v582
        %v586 = vadd.f32 %v575, %v583
        %v587 = vadd.f32 %v576, %v582
        %v588 = vrot.slane %v552, 3
        %v589 = vrot.slane %v554, 3
        %590 = vrot.lane.b32.xlu0 %v588, 125
        %v591 = vpop.permute.xlu0 %590
        %592 = vrot.lane.b32.xlu0 %v589, 125
        %v593 = vpop.permute.xlu0 %592
        %v594 = vsel %vm293, %v591, %v593
        %v597 = vadd.f32 %v586, %v594
        %v598 = vadd.f32 %v587, %v593
        %v599 = vrot.slane %v552, 4
        %v600 = vrot.slane %v554, 4
        %601 = vrot.lane.b32.xlu0 %v599, 112
        %v602 = vpop.permute.xlu0 %601
        %603 = vrot.lane.b32.xlu0 %v600, 112
        %v604 = vpop.permute.xlu0 %603
        %v605 = vsel %vm305, %v602, %v604
        %v608 = vadd.f32 %v597, %v605
        %v609 = vadd.f32 %v598, %v604
        %v610 = vrot.slane %v552, 5
        %v611 = vrot.slane %v554, 5
        %612 = vrot.lane.b32.xlu0 %v610, 111
        %v613 = vpop.permute.xlu0 %612
        %614 = vrot.lane.b32.xlu0 %v611, 111
        %v615 = vpop.permute.xlu0 %614
        %v616 = vsel %vm317, %v613, %v615
        %v619 = vadd.f32 %v608, %v616
        %v620 = vadd.f32 %v609, %v615
        %v621 = vrot.slane %v552, 6
        %v622 = vrot.slane %v554, 6
        %623 = vrot.lane.b32.xlu0 %v621, 110
        %v624 = vpop.permute.xlu0 %623
        %625 = vrot.lane.b32.xlu0 %v622, 110
        %v626 = vpop.permute.xlu0 %625
        %v627 = vsel %vm329, %v624, %v626
        %v630 = vadd.f32 %v619, %v627
        %v631 = vadd.f32 %v620, %v626
        %v632 = vrot.slane %v552, 7
        %v633 = vrot.slane %v554, 7
        %634 = vrot.lane.b32.xlu0 %v632, 109
        %v635 = vpop.permute.xlu0 %634
        %636 = vrot.lane.b32.xlu0 %v633, 109
        %v637 = vpop.permute.xlu0 %636
        %v638 = vsel %vm341, %v635, %v637
        %v641 = vadd.f32 %v630, %v638
        %v642 = vadd.f32 %v631, %v637
        %645 = vrot.lane.b32.xlu0 %v558, 96
        %v646 = vpop.permute.xlu0 %645
        %647 = vrot.lane.b32.xlu0 %v560, 96
        %v648 = vpop.permute.xlu0 %647
        %v649 = vsel %vm353, %v646, %v648
        %v652 = vadd.f32 %v641, %v649
        %v653 = vadd.f32 %v642, %v648
        %v654 = vrot.slane %v558, 1
        %v655 = vrot.slane %v560, 1
        %656 = vrot.lane.b32.xlu0 %v654, 95
        %v657 = vpop.permute.xlu0 %656
        %658 = vrot.lane.b32.xlu0 %v655, 95
        %v659 = vpop.permute.xlu0 %658
        %v660 = vsel %vm365, %v657, %v659
        %v663 = vadd.f32 %v652, %v660
        %v664 = vadd.f32 %v653, %v659
        %v665 = vrot.slane %v558, 2
        %v666 = vrot.slane %v560, 2
        %667 = vrot.lane.b32.xlu0 %v665, 94
        %v668 = vpop.permute.xlu0 %667
        %669 = vrot.lane.b32.xlu0 %v666, 94
        %v670 = vpop.permute.xlu0 %669
        %v671 = vsel %vm377, %v668, %v670
        %v674 = vadd.f32 %v663, %v671
        %v675 = vadd.f32 %v664, %v670
        %v676 = vrot.slane %v558, 3
        %v677 = vrot.slane %v560, 3
        %678 = vrot.lane.b32.xlu0 %v676, 93
        %v679 = vpop.permute.xlu0 %678
        %680 = vrot.lane.b32.xlu0 %v677, 93
        %v681 = vpop.permute.xlu0 %680
        %v682 = vsel %vm389, %v679, %v681
        %v685 = vadd.f32 %v674, %v682
        %v686 = vadd.f32 %v675, %v681
        %v687 = vrot.slane %v558, 4
        %v688 = vrot.slane %v560, 4
        %689 = vrot.lane.b32.xlu0 %v687, 80
        %v690 = vpop.permute.xlu0 %689
        %691 = vrot.lane.b32.xlu0 %v688, 80
        %v692 = vpop.permute.xlu0 %691
        %v693 = vsel %vm401, %v690, %v692
        %v696 = vadd.f32 %v685, %v693
        %v697 = vadd.f32 %v686, %v692
        %v698 = vrot.slane %v558, 5
        %v699 = vrot.slane %v560, 5
        %700 = vrot.lane.b32.xlu0 %v698, 79
        %v701 = vpop.permute.xlu0 %700
        %702 = vrot.lane.b32.xlu0 %v699, 79
        %v703 = vpop.permute.xlu0 %702
        %v704 = vsel %vm413, %v701, %v703
        %v707 = vadd.f32 %v696, %v704
        %v708 = vadd.f32 %v697, %v703
        %v709 = vrot.slane %v558, 6
        %v710 = vrot.slane %v560, 6
        %711 = vrot.lane.b32.xlu0 %v709, 78
        %v712 = vpop.permute.xlu0 %711
        %713 = vrot.lane.b32.xlu0 %v710, 78
        %v714 = vpop.permute.xlu0 %713
        %v715 = vsel %vm425, %v712, %v714
        %v718 = vadd.f32 %v707, %v715
        %v719 = vadd.f32 %v708, %v714
        %v720 = vrot.slane %v558, 7
        %v721 = vrot.slane %v560, 7
        %722 = vrot.lane.b32.xlu0 %v720, 77
        %v723 = vpop.permute.xlu0 %722
        %724 = vrot.lane.b32.xlu0 %v721, 77
        %v725 = vpop.permute.xlu0 %724
        %v726 = vsel %vm437, %v723, %v725
        %v729 = vadd.f32 %v718, %v726
        %v730 = vadd.f32 %v719, %v725
        %v731 = vmul.f32 %v729, 0.001
        %v732 = vmul.f32 %v730, 0.001
        %v735 = vcombine.low %v731, %v732
        %v737 = vunpack.c.l.s4 1966171168
        %v738 = vunpack.c.0.s8 %v737
        %v739 = vlaneseq
        %v740 = vshrl.u32 %v739, 7
        %v741 = vsub.s32 %v738, %v740
        %v742 = vrot.slane %v735, %v741
        %v744 = vunpack.c.l.s4 1966171168
        %v745 = vunpack.c.0.s8 %v744
        %v746 = vlaneseq
        %v747 = vshrl.u32 %v746, 7
        %v748 = vsub.s32 %v745, %v747
        %v749 = vrot.slane %v742, %v748
        %s751 = scalar_lea.vmem %s162, 2 [#allocation5]
        %752 = vst.msk [vmem:[%s751] sm:$0x3] %vm466, %v749
        %v753 = vld [vmem:[%s0] sm:$0xff]
        %v754 = vld [vmem:[%s0 + $0x8] sm:$0xff]
        %s755 = scalar_lea.vmem %s142, 16 [#allocation2]
        %v756 = vld [vmem:[%s755] sm:$0xff]
        %v758 = vcombine.high %v756, %v756
        %v760 = vsel %vm170, %v753, 0
        %v763 = vsel %vm170, %v754, 0
        %v765 = vsel %vm177, %v756, 0
        %v767 = vsel %vm177, %v758, 0
        %769 = vmatprep.subr.mxu0 %v767
        %770 = vmatpush1.msra.mxu0 %v765
        %771 = vmatprep.subr.mxu0 0.0
        %772 = vmatpush1.msra.mxu0 0.0
        %773 = vmatprep.subr.mxu0 0.0
        %774 = vmatpush1.msra.mxu0 0.0
        %775 = vmatprep.subr.mxu0 0.0
        %776 = vmatpush1.msra.mxu0 0.0
        %777 = vmatprep.subr.mxu0 0.0
        %778 = vmatpush1.msra.mxu0 0.0
        %779 = vmatprep.subr.mxu0 0.0
        %780 = vmatpush1.msra.mxu0 0.0
        %781 = vmatprep.subr.mxu0 0.0
        %782 = vmatpush1.msra.mxu0 0.0
        %783 = vmatprep.subr.mxu0 0.0
        %784 = vmatpush1.msra.mxu0 0.0
        %785 = vmatprep.subr.mxu0 0.0
        %786 = vmatpush1.msra.mxu0 0.0
        %787 = vmatprep.subr.mxu0 0.0
        %788 = vmatpush1.msra.mxu0 0.0
        %789 = vmatprep.subr.mxu0 0.0
        %790 = vmatpush1.msra.mxu0 0.0
        %791 = vmatprep.subr.mxu0 0.0
        %792 = vmatpush1.msra.mxu0 0.0
        %793 = vmatprep.subr.mxu0 0.0
        %794 = vmatpush1.msra.mxu0 0.0
        %795 = vmatprep.subr.mxu0 0.0
        %796 = vmatpush1.msra.mxu0 0.0
        %797 = vmatprep.subr.mxu0 0.0
        %798 = vmatpush1.msra.mxu0 0.0
        %799 = vmatprep.subr.mxu0 0.0
        %800 = vmatpush1.msra.mxu0 0.0
        %801 = vmatprep.subr.mxu0 0.0
        %802 = vmatpush1.msra.mxu0 0.0
        %803 = vmatprep.subr.mxu0 0.0
        %804 = vmatpush1.msra.mxu0 0.0
        %805 = vmatprep.subr.mxu0 0.0
        %806 = vmatpush1.msra.mxu0 0.0
        %807 = vmatprep.subr.mxu0 0.0
        %808 = vmatpush1.msra.mxu0 0.0
        %809 = vmatprep.subr.mxu0 0.0
        %810 = vmatpush1.msra.mxu0 0.0
        %811 = vmatprep.subr.mxu0 0.0
        %812 = vmatpush1.msra.mxu0 0.0
        %813 = vmatprep.subr.mxu0 0.0
        %814 = vmatpush1.msra.mxu0 0.0
        %815 = vmatprep.subr.mxu0 0.0
        %816 = vmatpush1.msra.mxu0 0.0
        %817 = vmatprep.subr.mxu0 0.0
        %818 = vmatpush1.msra.mxu0 0.0
        %819 = vmatprep.subr.mxu0 0.0
        %820 = vmatpush1.msra.mxu0 0.0
        %821 = vmatprep.subr.mxu0 0.0
        %822 = vmatpush1.msra.mxu0 0.0
        %823 = vmatprep.subr.mxu0 0.0
        %824 = vmatpush1.msra.mxu0 0.0
        %825 = vmatprep.subr.mxu0 0.0
        %826 = vmatpush1.msra.mxu0 0.0
        %827 = vmatprep.subr.mxu0 0.0
        %828 = vmatpush1.msra.mxu0 0.0
        %829 = vmatprep.subr.mxu0 0.0
        %830 = vmatpush1.msra.mxu0 0.0
        %831 = vmatprep.subr.mxu0 0.0
        %832 = vmatpush1.msra.mxu0 0.0
        %833 = vmatprep.mubr.f32.mxu0 0.0
        %834 = vmatmul.mubr.f32.gmra.mrb[0].mxu0 %v760
        %v835 = vpop.f32.mrb[0].mxu0
        %v836 = vadd.f32 0.0, %v835
        %v837 = vpop.f32.mrb[0].mxu0
        %v838 = vadd.f32 0.0, %v837
        %839 = vmatprep.mubr.f32.mxu0 0.0
        %840 = vmatmul.mubr.f32.gmra.mrb[0].mxu0 %v763
        %v841 = vpop.f32.mrb[0].mxu0
        %v842 = vadd.f32 0.0, %v841
        %v843 = vpop.f32.mrb[0].mxu0
        %v844 = vadd.f32 0.0, %v843
        %845 = vdwg.mxu0
        %v846 = vadd.f32 %v836, 0.0
        %v847 = vadd.f32 %v838, 0.0
        %v850 = vrot.slane %v836, 1
        %v851 = vrot.slane %v838, 1
        %852 = vrot.lane.b32.xlu0 %v850, 127
        %v853 = vpop.permute.xlu0 %852
        %854 = vrot.lane.b32.xlu0 %v851, 127
        %v855 = vpop.permute.xlu0 %854
        %v856 = vsel %vm269, %v853, %v855
        %v859 = vadd.f32 %v846, %v856
        %v860 = vadd.f32 %v847, %v855
        %v861 = vrot.slane %v836, 2
        %v862 = vrot.slane %v838, 2
        %863 = vrot.lane.b32.xlu0 %v861, 126
        %v864 = vpop.permute.xlu0 %863
        %865 = vrot.lane.b32.xlu0 %v862, 126
        %v866 = vpop.permute.xlu0 %865
        %v867 = vsel %vm281, %v864, %v866
        %v870 = vadd.f32 %v859, %v867
        %v871 = vadd.f32 %v860, %v866
        %v872 = vrot.slane %v836, 3
        %v873 = vrot.slane %v838, 3
        %874 = vrot.lane.b32.xlu0 %v872, 125
        %v875 = vpop.permute.xlu0 %874
        %876 = vrot.lane.b32.xlu0 %v873, 125
        %v877 = vpop.permute.xlu0 %876
        %v878 = vsel %vm293, %v875, %v877
        %v881 = vadd.f32 %v870, %v878
        %v882 = vadd.f32 %v871, %v877
        %v883 = vrot.slane %v836, 4
        %v884 = vrot.slane %v838, 4
        %885 = vrot.lane.b32.xlu0 %v883, 112
        %v886 = vpop.permute.xlu0 %885
        %887 = vrot.lane.b32.xlu0 %v884, 112
        %v888 = vpop.permute.xlu0 %887
        %v889 = vsel %vm305, %v886, %v888
        %v892 = vadd.f32 %v881, %v889
        %v893 = vadd.f32 %v882, %v888
        %v894 = vrot.slane %v836, 5
        %v895 = vrot.slane %v838, 5
        %896 = vrot.lane.b32.xlu0 %v894, 111
        %v897 = vpop.permute.xlu0 %896
        %898 = vrot.lane.b32.xlu0 %v895, 111
        %v899 = vpop.permute.xlu0 %898
        %v900 = vsel %vm317, %v897, %v899
        %v903 = vadd.f32 %v892, %v900
        %v904 = vadd.f32 %v893, %v899
        %v905 = vrot.slane %v836, 6
        %v906 = vrot.slane %v838, 6
        %907 = vrot.lane.b32.xlu0 %v905, 110
        %v908 = vpop.permute.xlu0 %907
        %909 = vrot.lane.b32.xlu0 %v906, 110
        %v910 = vpop.permute.xlu0 %909
        %v911 = vsel %vm329, %v908, %v910
        %v914 = vadd.f32 %v903, %v911
        %v915 = vadd.f32 %v904, %v910
        %v916 = vrot.slane %v836, 7
        %v917 = vrot.slane %v838, 7
        %918 = vrot.lane.b32.xlu0 %v916, 109
        %v919 = vpop.permute.xlu0 %918
        %920 = vrot.lane.b32.xlu0 %v917, 109
        %v921 = vpop.permute.xlu0 %920
        %v922 = vsel %vm341, %v919, %v921
        %v925 = vadd.f32 %v914, %v922
        %v926 = vadd.f32 %v915, %v921
        %929 = vrot.lane.b32.xlu0 %v842, 96
        %v930 = vpop.permute.xlu0 %929
        %931 = vrot.lane.b32.xlu0 %v844, 96
        %v932 = vpop.permute.xlu0 %931
        %v933 = vsel %vm353, %v930, %v932
        %v936 = vadd.f32 %v925, %v933
        %v937 = vadd.f32 %v926, %v932
        %v938 = vrot.slane %v842, 1
        %v939 = vrot.slane %v844, 1
        %940 = vrot.lane.b32.xlu0 %v938, 95
        %v941 = vpop.permute.xlu0 %940
        %942 = vrot.lane.b32.xlu0 %v939, 95
        %v943 = vpop.permute.xlu0 %942
        %v944 = vsel %vm365, %v941, %v943
        %v947 = vadd.f32 %v936, %v944
        %v948 = vadd.f32 %v937, %v943
        %v949 = vrot.slane %v842, 2
        %v950 = vrot.slane %v844, 2
        %951 = vrot.lane.b32.xlu0 %v949, 94
        %v952 = vpop.permute.xlu0 %951
        %953 = vrot.lane.b32.xlu0 %v950, 94
        %v954 = vpop.permute.xlu0 %953
        %v955 = vsel %vm377, %v952, %v954
        %v958 = vadd.f32 %v947, %v955
        %v959 = vadd.f32 %v948, %v954
        %v960 = vrot.slane %v842, 3
        %v961 = vrot.slane %v844, 3
        %962 = vrot.lane.b32.xlu0 %v960, 93
        %v963 = vpop.permute.xlu0 %962
        %964 = vrot.lane.b32.xlu0 %v961, 93
        %v965 = vpop.permute.xlu0 %964
        %v966 = vsel %vm389, %v963, %v965
        %v969 = vadd.f32 %v958, %v966
        %v970 = vadd.f32 %v959, %v965
        %v971 = vrot.slane %v842, 4
        %v972 = vrot.slane %v844, 4
        %973 = vrot.lane.b32.xlu0 %v971, 80
        %v974 = vpop.permute.xlu0 %973
        %975 = vrot.lane.b32.xlu0 %v972, 80
        %v976 = vpop.permute.xlu0 %975
        %v977 = vsel %vm401, %v974, %v976
        %v980 = vadd.f32 %v969, %v977
        %v981 = vadd.f32 %v970, %v976
        %v982 = vrot.slane %v842, 5
        %v983 = vrot.slane %v844, 5
        %984 = vrot.lane.b32.xlu0 %v982, 79
        %v985 = vpop.permute.xlu0 %984
        %986 = vrot.lane.b32.xlu0 %v983, 79
        %v987 = vpop.permute.xlu0 %986
        %v988 = vsel %vm413, %v985, %v987
        %v991 = vadd.f32 %v980, %v988
        %v992 = vadd.f32 %v981, %v987
        %v993 = vrot.slane %v842, 6
        %v994 = vrot.slane %v844, 6
        %995 = vrot.lane.b32.xlu0 %v993, 78
        %v996 = vpop.permute.xlu0 %995
        %997 = vrot.lane.b32.xlu0 %v994, 78
        %v998 = vpop.permute.xlu0 %997
        %v999 = vsel %vm425, %v996, %v998
        %v1002 = vadd.f32 %v991, %v999
        %v1003 = vadd.f32 %v992, %v998
        %v1004 = vrot.slane %v842, 7
        %v1005 = vrot.slane %v844, 7
        %1006 = vrot.lane.b32.xlu0 %v1004, 77
        %v1007 = vpop.permute.xlu0 %1006
        %1008 = vrot.lane.b32.xlu0 %v1005, 77
        %v1009 = vpop.permute.xlu0 %1008
        %v1010 = vsel %vm437, %v1007, %v1009
        %v1013 = vadd.f32 %v1002, %v1010
        %v1014 = vadd.f32 %v1003, %v1009
        %v1015 = vmul.f32 %v1013, 0.001
        %v1016 = vmul.f32 %v1014, 0.001
        %v1019 = vcombine.low %v1015, %v1016
        %v1021 = vunpack.c.l.s4 1966171168
        %v1022 = vunpack.c.0.s8 %v1021
        %v1023 = vlaneseq
        %v1024 = vshrl.u32 %v1023, 7
        %v1025 = vsub.s32 %v1022, %v1024
        %v1026 = vrot.slane %v1019, %v1025
        %v1028 = vunpack.c.l.s4 1966171168
        %v1029 = vunpack.c.0.s8 %v1028
        %v1030 = vlaneseq
        %v1031 = vshrl.u32 %v1030, 7
        %v1032 = vsub.s32 %v1029, %v1031
        %v1033 = vrot.slane %v1026, %v1032
        %s1035 = scalar_lea.vmem %s162, 4 [#allocation5]
        %1036 = vst.msk [vmem:[%s1035] sm:$0x3] %vm466, %v1033
        %v1037 = vld [vmem:[%s468] sm:$0xff]
        %v1038 = vld [vmem:[%s468 + $0x8] sm:$0xff]
        %s1039 = scalar_lea.vmem %s142, 24 [#allocation2]
        %v1040 = vld [vmem:[%s1039] sm:$0xff]
        %v1042 = vcombine.high %v1040, %v1040
        %v1044 = vsel %vm170, %v1037, 0
        %v1047 = vsel %vm170, %v1038, 0
        %v1049 = vsel %vm177, %v1040, 0
        %v1051 = vsel %vm177, %v1042, 0
        %1053 = vmatprep.subr.mxu0 %v1051
        %1054 = vmatpush1.msra.mxu0 %v1049
        %1055 = vmatprep.subr.mxu0 0.0
        %1056 = vmatpush1.msra.mxu0 0.0
        %1057 = vmatprep.subr.mxu0 0.0
        %1058 = vmatpush1.msra.mxu0 0.0
        %1059 = vmatprep.subr.mxu0 0.0
        %1060 = vmatpush1.msra.mxu0 0.0
        %1061 = vmatprep.subr.mxu0 0.0
        %1062 = vmatpush1.msra.mxu0 0.0
        %1063 = vmatprep.subr.mxu0 0.0
        %1064 = vmatpush1.msra.mxu0 0.0
        %1065 = vmatprep.subr.mxu0 0.0
        %1066 = vmatpush1.msra.mxu0 0.0
        %1067 = vmatprep.subr.mxu0 0.0
        %1068 = vmatpush1.msra.mxu0 0.0
        %1069 = vmatprep.subr.mxu0 0.0
        %1070 = vmatpush1.msra.mxu0 0.0
        %1071 = vmatprep.subr.mxu0 0.0
        %1072 = vmatpush1.msra.mxu0 0.0
        %1073 = vmatprep.subr.mxu0 0.0
        %1074 = vmatpush1.msra.mxu0 0.0
        %1075 = vmatprep.subr.mxu0 0.0
        %1076 = vmatpush1.msra.mxu0 0.0
        %1077 = vmatprep.subr.mxu0 0.0
        %1078 = vmatpush1.msra.mxu0 0.0
        %1079 = vmatprep.subr.mxu0 0.0
        %1080 = vmatpush1.msra.mxu0 0.0
        %1081 = vmatprep.subr.mxu0 0.0
        %1082 = vmatpush1.msra.mxu0 0.0
        %1083 = vmatprep.subr.mxu0 0.0
        %1084 = vmatpush1.msra.mxu0 0.0
        %1085 = vmatprep.subr.mxu0 0.0
        %1086 = vmatpush1.msra.mxu0 0.0
        %1087 = vmatprep.subr.mxu0 0.0
        %1088 = vmatpush1.msra.mxu0 0.0
        %1089 = vmatprep.subr.mxu0 0.0
        %1090 = vmatpush1.msra.mxu0 0.0
        %1091 = vmatprep.subr.mxu0 0.0
        %1092 = vmatpush1.msra.mxu0 0.0
        %1093 = vmatprep.subr.mxu0 0.0
        %1094 = vmatpush1.msra.mxu0 0.0
        %1095 = vmatprep.subr.mxu0 0.0
        %1096 = vmatpush1.msra.mxu0 0.0
        %1097 = vmatprep.subr.mxu0 0.0
        %1098 = vmatpush1.msra.mxu0 0.0
        %1099 = vmatprep.subr.mxu0 0.0
        %1100 = vmatpush1.msra.mxu0 0.0
        %1101 = vmatprep.subr.mxu0 0.0
        %1102 = vmatpush1.msra.mxu0 0.0
        %1103 = vmatprep.subr.mxu0 0.0
        %1104 = vmatpush1.msra.mxu0 0.0
        %1105 = vmatprep.subr.mxu0 0.0
        %1106 = vmatpush1.msra.mxu0 0.0
        %1107 = vmatprep.subr.mxu0 0.0
        %1108 = vmatpush1.msra.mxu0 0.0
        %1109 = vmatprep.subr.mxu0 0.0
        %1110 = vmatpush1.msra.mxu0 0.0
        %1111 = vmatprep.subr.mxu0 0.0
        %1112 = vmatpush1.msra.mxu0 0.0
        %1113 = vmatprep.subr.mxu0 0.0
        %1114 = vmatpush1.msra.mxu0 0.0
        %1115 = vmatprep.subr.mxu0 0.0
        %1116 = vmatpush1.msra.mxu0 0.0
        %1117 = vmatprep.mubr.f32.mxu0 0.0
        %1118 = vmatmul.mubr.f32.gmra.mrb[0].mxu0 %v1044
        %v1119 = vpop.f32.mrb[0].mxu0
        %v1120 = vadd.f32 0.0, %v1119
        %v1121 = vpop.f32.mrb[0].mxu0
        %v1122 = vadd.f32 0.0, %v1121
        %1123 = vmatprep.mubr.f32.mxu0 0.0
        %1124 = vmatmul.mubr.f32.gmra.mrb[0].mxu0 %v1047
        %v1125 = vpop.f32.mrb[0].mxu0
        %v1126 = vadd.f32 0.0, %v1125
        %v1127 = vpop.f32.mrb[0].mxu0
        %v1128 = vadd.f32 0.0, %v1127
        %1129 = vdwg.mxu0
        %v1130 = vadd.f32 %v1120, 0.0
        %v1131 = vadd.f32 %v1122, 0.0
        %v1134 = vrot.slane %v1120, 1
        %v1135 = vrot.slane %v1122, 1
        %1136 = vrot.lane.b32.xlu0 %v1134, 127
        %v1137 = vpop.permute.xlu0 %1136
        %1138 = vrot.lane.b32.xlu0 %v1135, 127
        %v1139 = vpop.permute.xlu0 %1138
        %v1140 = vsel %vm269, %v1137, %v1139
        %v1143 = vadd.f32 %v1130, %v1140
        %v1144 = vadd.f32 %v1131, %v1139
        %v1145 = vrot.slane %v1120, 2
        %v1146 = vrot.slane %v1122, 2
        %1147 = vrot.lane.b32.xlu0 %v1145, 126
        %v1148 = vpop.permute.xlu0 %1147
        %1149 = vrot.lane.b32.xlu0 %v1146, 126
        %v1150 = vpop.permute.xlu0 %1149
        %v1151 = vsel %vm281, %v1148, %v1150
        %v1154 = vadd.f32 %v1143, %v1151
        %v1155 = vadd.f32 %v1144, %v1150
        %v1156 = vrot.slane %v1120, 3
        %v1157 = vrot.slane %v1122, 3
        %1158 = vrot.lane.b32.xlu0 %v1156, 125
        %v1159 = vpop.permute.xlu0 %1158
        %1160 = vrot.lane.b32.xlu0 %v1157, 125
        %v1161 = vpop.permute.xlu0 %1160
        %v1162 = vsel %vm293, %v1159, %v1161
        %v1165 = vadd.f32 %v1154, %v1162
        %v1166 = vadd.f32 %v1155, %v1161
        %v1167 = vrot.slane %v1120, 4
        %v1168 = vrot.slane %v1122, 4
        %1169 = vrot.lane.b32.xlu0 %v1167, 112
        %v1170 = vpop.permute.xlu0 %1169
        %1171 = vrot.lane.b32.xlu0 %v1168, 112
        %v1172 = vpop.permute.xlu0 %1171
        %v1173 = vsel %vm305, %v1170, %v1172
        %v1176 = vadd.f32 %v1165, %v1173
        %v1177 = vadd.f32 %v1166, %v1172
        %v1178 = vrot.slane %v1120, 5
        %v1179 = vrot.slane %v1122, 5
        %1180 = vrot.lane.b32.xlu0 %v1178, 111
        %v1181 = vpop.permute.xlu0 %1180
        %1182 = vrot.lane.b32.xlu0 %v1179, 111
        %v1183 = vpop.permute.xlu0 %1182
        %v1184 = vsel %vm317, %v1181, %v1183
        %v1187 = vadd.f32 %v1176, %v1184
        %v1188 = vadd.f32 %v1177, %v1183
        %v1189 = vrot.slane %v1120, 6
        %v1190 = vrot.slane %v1122, 6
        %1191 = vrot.lane.b32.xlu0 %v1189, 110
        %v1192 = vpop.permute.xlu0 %1191
        %1193 = vrot.lane.b32.xlu0 %v1190, 110
        %v1194 = vpop.permute.xlu0 %1193
        %v1195 = vsel %vm329, %v1192, %v1194
        %v1198 = vadd.f32 %v1187, %v1195
        %v1199 = vadd.f32 %v1188, %v1194
        %v1200 = vrot.slane %v1120, 7
        %v1201 = vrot.slane %v1122, 7
        %1202 = vrot.lane.b32.xlu0 %v1200, 109
        %v1203 = vpop.permute.xlu0 %1202
        %1204 = vrot.lane.b32.xlu0 %v1201, 109
        %v1205 = vpop.permute.xlu0 %1204
        %v1206 = vsel %vm341, %v1203, %v1205
        %v1209 = vadd.f32 %v1198, %v1206
        %v1210 = vadd.f32 %v1199, %v1205
        %1213 = vrot.lane.b32.xlu0 %v1126, 96
        %v1214 = vpop.permute.xlu0 %1213
        %1215 = vrot.lane.b32.xlu0 %v1128, 96
        %v1216 = vpop.permute.xlu0 %1215
        %v1217 = vsel %vm353, %v1214, %v1216
        %v1220 = vadd.f32 %v1209, %v1217
        %v1221 = vadd.f32 %v1210, %v1216
        %v1222 = vrot.slane %v1126, 1
        %v1223 = vrot.slane %v1128, 1
        %1224 = vrot.lane.b32.xlu0 %v1222, 95
        %v1225 = vpop.permute.xlu0 %1224
        %1226 = vrot.lane.b32.xlu0 %v1223, 95
        %v1227 = vpop.permute.xlu0 %1226
        %v1228 = vsel %vm365, %v1225, %v1227
        %v1231 = vadd.f32 %v1220, %v1228
        %v1232 = vadd.f32 %v1221, %v1227
        %v1233 = vrot.slane %v1126, 2
        %v1234 = vrot.slane %v1128, 2
        %1235 = vrot.lane.b32.xlu0 %v1233, 94
        %v1236 = vpop.permute.xlu0 %1235
        %1237 = vrot.lane.b32.xlu0 %v1234, 94
        %v1238 = vpop.permute.xlu0 %1237
        %v1239 = vsel %vm377, %v1236, %v1238
        %v1242 = vadd.f32 %v1231, %v1239
        %v1243 = vadd.f32 %v1232, %v1238
        %v1244 = vrot.slane %v1126, 3
        %v1245 = vrot.slane %v1128, 3
        %1246 = vrot.lane.b32.xlu0 %v1244, 93
        %v1247 = vpop.permute.xlu0 %1246
        %1248 = vrot.lane.b32.xlu0 %v1245, 93
        %v1249 = vpop.permute.xlu0 %1248
        %v1250 = vsel %vm389, %v1247, %v1249
        %v1253 = vadd.f32 %v1242, %v1250
        %v1254 = vadd.f32 %v1243, %v1249
        %v1255 = vrot.slane %v1126, 4
        %v1256 = vrot.slane %v1128, 4
        %1257 = vrot.lane.b32.xlu0 %v1255, 80
        %v1258 = vpop.permute.xlu0 %1257
        %1259 = vrot.lane.b32.xlu0 %v1256, 80
        %v1260 = vpop.permute.xlu0 %1259
        %v1261 = vsel %vm401, %v1258, %v1260
        %v1264 = vadd.f32 %v1253, %v1261
        %v1265 = vadd.f32 %v1254, %v1260
        %v1266 = vrot.slane %v1126, 5
        %v1267 = vrot.slane %v1128, 5
        %1268 = vrot.lane.b32.xlu0 %v1266, 79
        %v1269 = vpop.permute.xlu0 %1268
        %1270 = vrot.lane.b32.xlu0 %v1267, 79
        %v1271 = vpop.permute.xlu0 %1270
        %v1272 = vsel %vm413, %v1269, %v1271
        %v1275 = vadd.f32 %v1264, %v1272
        %v1276 = vadd.f32 %v1265, %v1271
        %v1277 = vrot.slane %v1126, 6
        %v1278 = vrot.slane %v1128, 6
        %1279 = vrot.lane.b32.xlu0 %v1277, 78
        %v1280 = vpop.permute.xlu0 %1279
        %1281 = vrot.lane.b32.xlu0 %v1278, 78
        %v1282 = vpop.permute.xlu0 %1281
        %v1283 = vsel %vm425, %v1280, %v1282
        %v1286 = vadd.f32 %v1275, %v1283
        %v1287 = vadd.f32 %v1276, %v1282
        %v1288 = vrot.slane %v1126, 7
        %v1289 = vrot.slane %v1128, 7
        %1290 = vrot.lane.b32.xlu0 %v1288, 77
        %v1291 = vpop.permute.xlu0 %1290
        %1292 = vrot.lane.b32.xlu0 %v1289, 77
        %v1293 = vpop.permute.xlu0 %1292
        %v1294 = vsel %vm437, %v1291, %v1293
        %v1297 = vadd.f32 %v1286, %v1294
        %v1298 = vadd.f32 %v1287, %v1293
        %v1299 = vmul.f32 %v1297, 0.001
        %v1300 = vmul.f32 %v1298, 0.001
        %v1303 = vcombine.low %v1299, %v1300
        %v1305 = vunpack.c.l.s4 1966171168
        %v1306 = vunpack.c.0.s8 %v1305
        %v1307 = vlaneseq
        %v1308 = vshrl.u32 %v1307, 7
        %v1309 = vsub.s32 %v1306, %v1308
        %v1310 = vrot.slane %v1303, %v1309
        %v1312 = vunpack.c.l.s4 1966171168
        %v1313 = vunpack.c.0.s8 %v1312
        %v1314 = vlaneseq
        %v1315 = vshrl.u32 %v1314, 7
        %v1316 = vsub.s32 %v1313, %v1315
        %v1317 = vrot.slane %v1310, %v1316
        %s1319 = scalar_lea.vmem %s162, 6 [#allocation5]
        %1320 = vst.msk [vmem:[%s1319] sm:$0x3] %vm466, %v1317
        %v1321 = vld [vmem:[%s0] sm:$0xff]
        %v1322 = vld [vmem:[%s0 + $0x8] sm:$0xff]
        %s1323 = scalar_lea.vmem %s142, 32 [#allocation2]
        %v1324 = vld [vmem:[%s1323] sm:$0xff]
        %v1326 = vcombine.high %v1324, %v1324
        %v1328 = vsel %vm170, %v1321, 0
        %v1331 = vsel %vm170, %v1322, 0
        %v1333 = vsel %vm177, %v1324, 0
        %v1335 = vsel %vm177, %v1326, 0
        %1337 = vmatprep.subr.mxu0 %v1335
        %1338 = vmatpush1.msra.mxu0 %v1333
        %1339 = vmatprep.subr.mxu0 0.0
        %1340 = vmatpush1.msra.mxu0 0.0
        %1341 = vmatprep.subr.mxu0 0.0
        %1342 = vmatpush1.msra.mxu0 0.0
        %1343 = vmatprep.subr.mxu0 0.0
        %1344 = vmatpush1.msra.mxu0 0.0
        %1345 = vmatprep.subr.mxu0 0.0
        %1346 = vmatpush1.msra.mxu0 0.0
        %1347 = vmatprep.subr.mxu0 0.0
        %1348 = vmatpush1.msra.mxu0 0.0
        %1349 = vmatprep.subr.mxu0 0.0
        %1350 = vmatpush1.msra.mxu0 0.0
        %1351 = vmatprep.subr.mxu0 0.0
        %1352 = vmatpush1.msra.mxu0 0.0
        %1353 = vmatprep.subr.mxu0 0.0
        %1354 = vmatpush1.msra.mxu0 0.0
        %1355 = vmatprep.subr.mxu0 0.0
        %1356 = vmatpush1.msra.mxu0 0.0
        %1357 = vmatprep.subr.mxu0 0.0
        %1358 = vmatpush1.msra.mxu0 0.0
        %1359 = vmatprep.subr.mxu0 0.0
        %1360 = vmatpush1.msra.mxu0 0.0
        %1361 = vmatprep.subr.mxu0 0.0
        %1362 = vmatpush1.msra.mxu0 0.0
        %1363 = vmatprep.subr.mxu0 0.0
        %1364 = vmatpush1.msra.mxu0 0.0
        %1365 = vmatprep.subr.mxu0 0.0
        %1366 = vmatpush1.msra.mxu0 0.0
        %1367 = vmatprep.subr.mxu0 0.0
        %1368 = vmatpush1.msra.mxu0 0.0
        %1369 = vmatprep.subr.mxu0 0.0
        %1370 = vmatpush1.msra.mxu0 0.0
        %1371 = vmatprep.subr.mxu0 0.0
        %1372 = vmatpush1.msra.mxu0 0.0
        %1373 = vmatprep.subr.mxu0 0.0
        %1374 = vmatpush1.msra.mxu0 0.0
        %1375 = vmatprep.subr.mxu0 0.0
        %1376 = vmatpush1.msra.mxu0 0.0
        %1377 = vmatprep.subr.mxu0 0.0
        %1378 = vmatpush1.msra.mxu0 0.0
        %1379 = vmatprep.subr.mxu0 0.0
        %1380 = vmatpush1.msra.mxu0 0.0
        %1381 = vmatprep.subr.mxu0 0.0
        %1382 = vmatpush1.msra.mxu0 0.0
        %1383 = vmatprep.subr.mxu0 0.0
        %1384 = vmatpush1.msra.mxu0 0.0
        %1385 = vmatprep.subr.mxu0 0.0
        %1386 = vmatpush1.msra.mxu0 0.0
        %1387 = vmatprep.subr.mxu0 0.0
        %1388 = vmatpush1.msra.mxu0 0.0
        %1389 = vmatprep.subr.mxu0 0.0
        %1390 = vmatpush1.msra.mxu0 0.0
        %1391 = vmatprep.subr.mxu0 0.0
        %1392 = vmatpush1.msra.mxu0 0.0
        %1393 = vmatprep.subr.mxu0 0.0
        %1394 = vmatpush1.msra.mxu0 0.0
        %1395 = vmatprep.subr.mxu0 0.0
        %1396 = vmatpush1.msra.mxu0 0.0
        %1397 = vmatprep.subr.mxu0 0.0
        %1398 = vmatpush1.msra.mxu0 0.0
        %1399 = vmatprep.subr.mxu0 0.0
        %1400 = vmatpush1.msra.mxu0 0.0
        %1401 = vmatprep.mubr.f32.mxu0 0.0
        %1402 = vmatmul.mubr.f32.gmra.mrb[0].mxu0 %v1328
        %v1403 = vpop.f32.mrb[0].mxu0
        %v1404 = vadd.f32 0.0, %v1403
        %v1405 = vpop.f32.mrb[0].mxu0
        %v1406 = vadd.f32 0.0, %v1405
        %1407 = vmatprep.mubr.f32.mxu0 0.0
        %1408 = vmatmul.mubr.f32.gmra.mrb[0].mxu0 %v1331
        %v1409 = vpop.f32.mrb[0].mxu0
        %v1410 = vadd.f32 0.0, %v1409
        %v1411 = vpop.f32.mrb[0].mxu0
        %v1412 = vadd.f32 0.0, %v1411
        %1413 = vdwg.mxu0
        %v1414 = vadd.f32 %v1404, 0.0
        %v1415 = vadd.f32 %v1406, 0.0
        %v1418 = vrot.slane %v1404, 1
        %v1419 = vrot.slane %v1406, 1
        %1420 = vrot.lane.b32.xlu0 %v1418, 127
        %v1421 = vpop.permute.xlu0 %1420
        %1422 = vrot.lane.b32.xlu0 %v1419, 127
        %v1423 = vpop.permute.xlu0 %1422
        %v1424 = vsel %vm269, %v1421, %v1423
        %v1427 = vadd.f32 %v1414, %v1424
        %v1428 = vadd.f32 %v1415, %v1423
        %v1429 = vrot.slane %v1404, 2
        %v1430 = vrot.slane %v1406, 2
        %1431 = vrot.lane.b32.xlu0 %v1429, 126
        %v1432 = vpop.permute.xlu0 %1431
        %1433 = vrot.lane.b32.xlu0 %v1430, 126
        %v1434 = vpop.permute.xlu0 %1433
        %v1435 = vsel %vm281, %v1432, %v1434
        %v1438 = vadd.f32 %v1427, %v1435
        %v1439 = vadd.f32 %v1428, %v1434
        %v1440 = vrot.slane %v1404, 3
        %v1441 = vrot.slane %v1406, 3
        %1442 = vrot.lane.b32.xlu0 %v1440, 125
        %v1443 = vpop.permute.xlu0 %1442
        %1444 = vrot.lane.b32.xlu0 %v1441, 125
        %v1445 = vpop.permute.xlu0 %1444
        %v1446 = vsel %vm293, %v1443, %v1445
        %v1449 = vadd.f32 %v1438, %v1446
        %v1450 = vadd.f32 %v1439, %v1445
        %v1451 = vrot.slane %v1404, 4
        %v1452 = vrot.slane %v1406, 4
        %1453 = vrot.lane.b32.xlu0 %v1451, 112
        %v1454 = vpop.permute.xlu0 %1453
        %1455 = vrot.lane.b32.xlu0 %v1452, 112
        %v1456 = vpop.permute.xlu0 %1455
        %v1457 = vsel %vm305, %v1454, %v1456
        %v1460 = vadd.f32 %v1449, %v1457
        %v1461 = vadd.f32 %v1450, %v1456
        %v1462 = vrot.slane %v1404, 5
        %v1463 = vrot.slane %v1406, 5
        %1464 = vrot.lane.b32.xlu0 %v1462, 111
        %v1465 = vpop.permute.xlu0 %1464
        %1466 = vrot.lane.b32.xlu0 %v1463, 111
        %v1467 = vpop.permute.xlu0 %1466
        %v1468 = vsel %vm317, %v1465, %v1467
        %v1471 = vadd.f32 %v1460, %v1468
        %v1472 = vadd.f32 %v1461, %v1467
        %v1473 = vrot.slane %v1404, 6
        %v1474 = vrot.slane %v1406, 6
        %1475 = vrot.lane.b32.xlu0 %v1473, 110
        %v1476 = vpop.permute.xlu0 %1475
        %1477 = vrot.lane.b32.xlu0 %v1474, 110
        %v1478 = vpop.permute.xlu0 %1477
        %v1479 = vsel %vm329, %v1476, %v1478
        %v1482 = vadd.f32 %v1471, %v1479
        %v1483 = vadd.f32 %v1472, %v1478
        %v1484 = vrot.slane %v1404, 7
        %v1485 = vrot.slane %v1406, 7
        %1486 = vrot.lane.b32.xlu0 %v1484, 109
        %v1487 = vpop.permute.xlu0 %1486
        %1488 = vrot.lane.b32.xlu0 %v1485, 109
        %v1489 = vpop.permute.xlu0 %1488
        %v1490 = vsel %vm341, %v1487, %v1489
        %v1493 = vadd.f32 %v1482, %v1490
        %v1494 = vadd.f32 %v1483, %v1489
        %1497 = vrot.lane.b32.xlu0 %v1410, 96
        %v1498 = vpop.permute.xlu0 %1497
        %1499 = vrot.lane.b32.xlu0 %v1412, 96
        %v1500 = vpop.permute.xlu0 %1499
        %v1501 = vsel %vm353, %v1498, %v1500
        %v1504 = vadd.f32 %v1493, %v1501
        %v1505 = vadd.f32 %v1494, %v1500
        %v1506 = vrot.slane %v1410, 1
        %v1507 = vrot.slane %v1412, 1
        %1508 = vrot.lane.b32.xlu0 %v1506, 95
        %v1509 = vpop.permute.xlu0 %1508
        %1510 = vrot.lane.b32.xlu0 %v1507, 95
        %v1511 = vpop.permute.xlu0 %1510
        %v1512 = vsel %vm365, %v1509, %v1511
        %v1515 = vadd.f32 %v1504, %v1512
        %v1516 = vadd.f32 %v1505, %v1511
        %v1517 = vrot.slane %v1410, 2
        %v1518 = vrot.slane %v1412, 2
        %1519 = vrot.lane.b32.xlu0 %v1517, 94
        %v1520 = vpop.permute.xlu0 %1519
        %1521 = vrot.lane.b32.xlu0 %v1518, 94
        %v1522 = vpop.permute.xlu0 %1521
        %v1523 = vsel %vm377, %v1520, %v1522
        %v1526 = vadd.f32 %v1515, %v1523
        %v1527 = vadd.f32 %v1516, %v1522
        %v1528 = vrot.slane %v1410, 3
        %v1529 = vrot.slane %v1412, 3
        %1530 = vrot.lane.b32.xlu0 %v1528, 93
        %v1531 = vpop.permute.xlu0 %1530
        %1532 = vrot.lane.b32.xlu0 %v1529, 93
        %v1533 = vpop.permute.xlu0 %1532
        %v1534 = vsel %vm389, %v1531, %v1533
        %v1537 = vadd.f32 %v1526, %v1534
        %v1538 = vadd.f32 %v1527, %v1533
        %v1539 = vrot.slane %v1410, 4
        %v1540 = vrot.slane %v1412, 4
        %1541 = vrot.lane.b32.xlu0 %v1539, 80
        %v1542 = vpop.permute.xlu0 %1541
        %1543 = vrot.lane.b32.xlu0 %v1540, 80
        %v1544 = vpop.permute.xlu0 %1543
        %v1545 = vsel %vm401, %v1542, %v1544
        %v1548 = vadd.f32 %v1537, %v1545
        %v1549 = vadd.f32 %v1538, %v1544
        %v1550 = vrot.slane %v1410, 5
        %v1551 = vrot.slane %v1412, 5
        %1552 = vrot.lane.b32.xlu0 %v1550, 79
        %v1553 = vpop.permute.xlu0 %1552
        %1554 = vrot.lane.b32.xlu0 %v1551, 79
        %v1555 = vpop.permute.xlu0 %1554
        %v1556 = vsel %vm413, %v1553, %v1555
        %v1559 = vadd.f32 %v1548, %v1556
        %v1560 = vadd.f32 %v1549, %v1555
        %v1561 = vrot.slane %v1410, 6
        %v1562 = vrot.slane %v1412, 6
        %1563 = vrot.lane.b32.xlu0 %v1561, 78
        %v1564 = vpop.permute.xlu0 %1563
        %1565 = vrot.lane.b32.xlu0 %v1562, 78
        %v1566 = vpop.permute.xlu0 %1565
        %v1567 = vsel %vm425, %v1564, %v1566
        %v1570 = vadd.f32 %v1559, %v1567
        %v1571 = vadd.f32 %v1560, %v1566
        %v1572 = vrot.slane %v1410, 7
        %v1573 = vrot.slane %v1412, 7
        %1574 = vrot.lane.b32.xlu0 %v1572, 77
        %v1575 = vpop.permute.xlu0 %1574
        %1576 = vrot.lane.b32.xlu0 %v1573, 77
        %v1577 = vpop.permute.xlu0 %1576
        %v1578 = vsel %vm437, %v1575, %v1577
        %v1581 = vadd.f32 %v1570, %v1578
        %v1582 = vadd.f32 %v1571, %v1577
        %v1583 = vmul.f32 %v1581, 0.001
        %v1584 = vmul.f32 %v1582, 0.001
        %v1587 = vcombine.low %v1583, %v1584
        %v1589 = vunpack.c.l.s4 1966171168
        %v1590 = vunpack.c.0.s8 %v1589
        %v1591 = vlaneseq
        %v1592 = vshrl.u32 %v1591, 7
        %v1593 = vsub.s32 %v1590, %v1592
        %v1594 = vrot.slane %v1587, %v1593
        %v1596 = vunpack.c.l.s4 1966171168
        %v1597 = vunpack.c.0.s8 %v1596
        %v1598 = vlaneseq
        %v1599 = vshrl.u32 %v1598, 7
        %v1600 = vsub.s32 %v1597, %v1599
        %v1601 = vrot.slane %v1594, %v1600
        %s1603 = scalar_lea.vmem %s162, 8 [#allocation5]
        %1604 = vst.msk [vmem:[%s1603] sm:$0x3] %vm466, %v1601
        %v1605 = vld [vmem:[%s468] sm:$0xff]
        %v1606 = vld [vmem:[%s468 + $0x8] sm:$0xff]
        %s1607 = scalar_lea.vmem %s142, 40 [#allocation2]
        %v1608 = vld [vmem:[%s1607] sm:$0xff]
        %v1610 = vcombine.high %v1608, %v1608
        %v1612 = vsel %vm170, %v1605, 0
        %v1615 = vsel %vm170, %v1606, 0
        %v1617 = vsel %vm177, %v1608, 0
        %v1619 = vsel %vm177, %v1610, 0
        %1621 = vmatprep.subr.mxu0 %v1619
        %1622 = vmatpush1.msra.mxu0 %v1617
        %1623 = vmatprep.subr.mxu0 0.0
        %1624 = vmatpush1.msra.mxu0 0.0
        %1625 = vmatprep.subr.mxu0 0.0
        %1626 = vmatpush1.msra.mxu0 0.0
        %1627 = vmatprep.subr.mxu0 0.0
        %1628 = vmatpush1.msra.mxu0 0.0
        %1629 = vmatprep.subr.mxu0 0.0
        %1630 = vmatpush1.msra.mxu0 0.0
        %1631 = vmatprep.subr.mxu0 0.0
        %1632 = vmatpush1.msra.mxu0 0.0
        %1633 = vmatprep.subr.mxu0 0.0
        %1634 = vmatpush1.msra.mxu0 0.0
        %1635 = vmatprep.subr.mxu0 0.0
        %1636 = vmatpush1.msra.mxu0 0.0
        %1637 = vmatprep.subr.mxu0 0.0
        %1638 = vmatpush1.msra.mxu0 0.0
        %1639 = vmatprep.subr.mxu0 0.0
        %1640 = vmatpush1.msra.mxu0 0.0
        %1641 = vmatprep.subr.mxu0 0.0
        %1642 = vmatpush1.msra.mxu0 0.0
        %1643 = vmatprep.subr.mxu0 0.0
        %1644 = vmatpush1.msra.mxu0 0.0
        %1645 = vmatprep.subr.mxu0 0.0
        %1646 = vmatpush1.msra.mxu0 0.0
        %1647 = vmatprep.subr.mxu0 0.0
        %1648 = vmatpush1.msra.mxu0 0.0
        %1649 = vmatprep.subr.mxu0 0.0
        %1650 = vmatpush1.msra.mxu0 0.0
        %1651 = vmatprep.subr.mxu0 0.0
        %1652 = vmatpush1.msra.mxu0 0.0
        %1653 = vmatprep.subr.mxu0 0.0
        %1654 = vmatpush1.msra.mxu0 0.0
        %1655 = vmatprep.subr.mxu0 0.0
        %1656 = vmatpush1.msra.mxu0 0.0
        %1657 = vmatprep.subr.mxu0 0.0
        %1658 = vmatpush1.msra.mxu0 0.0
        %1659 = vmatprep.subr.mxu0 0.0
        %1660 = vmatpush1.msra.mxu0 0.0
        %1661 = vmatprep.subr.mxu0 0.0
        %1662 = vmatpush1.msra.mxu0 0.0
        %1663 = vmatprep.subr.mxu0 0.0
        %1664 = vmatpush1.msra.mxu0 0.0
        %1665 = vmatprep.subr.mxu0 0.0
        %1666 = vmatpush1.msra.mxu0 0.0
        %1667 = vmatprep.subr.mxu0 0.0
        %1668 = vmatpush1.msra.mxu0 0.0
        %1669 = vmatprep.subr.mxu0 0.0
        %1670 = vmatpush1.msra.mxu0 0.0
        %1671 = vmatprep.subr.mxu0 0.0
        %1672 = vmatpush1.msra.mxu0 0.0
        %1673 = vmatprep.subr.mxu0 0.0
        %1674 = vmatpush1.msra.mxu0 0.0
        %1675 = vmatprep.subr.mxu0 0.0
        %1676 = vmatpush1.msra.mxu0 0.0
        %1677 = vmatprep.subr.mxu0 0.0
        %1678 = vmatpush1.msra.mxu0 0.0
        %1679 = vmatprep.subr.mxu0 0.0
        %1680 = vmatpush1.msra.mxu0 0.0
        %1681 = vmatprep.subr.mxu0 0.0
        %1682 = vmatpush1.msra.mxu0 0.0
        %1683 = vmatprep.subr.mxu0 0.0
        %1684 = vmatpush1.msra.mxu0 0.0
        %1685 = vmatprep.mubr.f32.mxu0 0.0
        %1686 = vmatmul.mubr.f32.gmra.mrb[0].mxu0 %v1612
        %v1687 = vpop.f32.mrb[0].mxu0
        %v1688 = vadd.f32 0.0, %v1687
        %v1689 = vpop.f32.mrb[0].mxu0
        %v1690 = vadd.f32 0.0, %v1689
        %1691 = vmatprep.mubr.f32.mxu0 0.0
        %1692 = vmatmul.mubr.f32.gmra.mrb[0].mxu0 %v1615
        %v1693 = vpop.f32.mrb[0].mxu0
        %v1694 = vadd.f32 0.0, %v1693
        %v1695 = vpop.f32.mrb[0].mxu0
        %v1696 = vadd.f32 0.0, %v1695
        %1697 = vdwg.mxu0
        %v1698 = vadd.f32 %v1688, 0.0
        %v1699 = vadd.f32 %v1690, 0.0
        %v1702 = vrot.slane %v1688, 1
        %v1703 = vrot.slane %v1690, 1
        %1704 = vrot.lane.b32.xlu0 %v1702, 127
        %v1705 = vpop.permute.xlu0 %1704
        %1706 = vrot.lane.b32.xlu0 %v1703, 127
        %v1707 = vpop.permute.xlu0 %1706
        %v1708 = vsel %vm269, %v1705, %v1707
        %v1711 = vadd.f32 %v1698, %v1708
        %v1712 = vadd.f32 %v1699, %v1707
        %v1713 = vrot.slane %v1688, 2
        %v1714 = vrot.slane %v1690, 2
        %1715 = vrot.lane.b32.xlu0 %v1713, 126
        %v1716 = vpop.permute.xlu0 %1715
        %1717 = vrot.lane.b32.xlu0 %v1714, 126
        %v1718 = vpop.permute.xlu0 %1717
        %v1719 = vsel %vm281, %v1716, %v1718
        %v1722 = vadd.f32 %v1711, %v1719
        %v1723 = vadd.f32 %v1712, %v1718
        %v1724 = vrot.slane %v1688, 3
        %v1725 = vrot.slane %v1690, 3
        %1726 = vrot.lane.b32.xlu0 %v1724, 125
        %v1727 = vpop.permute.xlu0 %1726
        %1728 = vrot.lane.b32.xlu0 %v1725, 125
        %v1729 = vpop.permute.xlu0 %1728
        %v1730 = vsel %vm293, %v1727, %v1729
        %v1733 = vadd.f32 %v1722, %v1730
        %v1734 = vadd.f32 %v1723, %v1729
        %v1735 = vrot.slane %v1688, 4
        %v1736 = vrot.slane %v1690, 4
        %1737 = vrot.lane.b32.xlu0 %v1735, 112
        %v1738 = vpop.permute.xlu0 %1737
        %1739 = vrot.lane.b32.xlu0 %v1736, 112
        %v1740 = vpop.permute.xlu0 %1739
        %v1741 = vsel %vm305, %v1738, %v1740
        %v1744 = vadd.f32 %v1733, %v1741
        %v1745 = vadd.f32 %v1734, %v1740
        %v1746 = vrot.slane %v1688, 5
        %v1747 = vrot.slane %v1690, 5
        %1748 = vrot.lane.b32.xlu0 %v1746, 111
        %v1749 = vpop.permute.xlu0 %1748
        %1750 = vrot.lane.b32.xlu0 %v1747, 111
        %v1751 = vpop.permute.xlu0 %1750
        %v1752 = vsel %vm317, %v1749, %v1751
        %v1755 = vadd.f32 %v1744, %v1752
        %v1756 = vadd.f32 %v1745, %v1751
        %v1757 = vrot.slane %v1688, 6
        %v1758 = vrot.slane %v1690, 6
        %1759 = vrot.lane.b32.xlu0 %v1757, 110
        %v1760 = vpop.permute.xlu0 %1759
        %1761 = vrot.lane.b32.xlu0 %v1758, 110
        %v1762 = vpop.permute.xlu0 %1761
        %v1763 = vsel %vm329, %v1760, %v1762
        %v1766 = vadd.f32 %v1755, %v1763
        %v1767 = vadd.f32 %v1756, %v1762
        %v1768 = vrot.slane %v1688, 7
        %v1769 = vrot.slane %v1690, 7
        %1770 = vrot.lane.b32.xlu0 %v1768, 109
        %v1771 = vpop.permute.xlu0 %1770
        %1772 = vrot.lane.b32.xlu0 %v1769, 109
        %v1773 = vpop.permute.xlu0 %1772
        %v1774 = vsel %vm341, %v1771, %v1773
        %v1777 = vadd.f32 %v1766, %v1774
        %v1778 = vadd.f32 %v1767, %v1773
        %1781 = vrot.lane.b32.xlu0 %v1694, 96
        %v1782 = vpop.permute.xlu0 %1781
        %1783 = vrot.lane.b32.xlu0 %v1696, 96
        %v1784 = vpop.permute.xlu0 %1783
        %v1785 = vsel %vm353, %v1782, %v1784
        %v1788 = vadd.f32 %v1777, %v1785
        %v1789 = vadd.f32 %v1778, %v1784
        %v1790 = vrot.slane %v1694, 1
        %v1791 = vrot.slane %v1696, 1
        %1792 = vrot.lane.b32.xlu0 %v1790, 95
        %v1793 = vpop.permute.xlu0 %1792
        %1794 = vrot.lane.b32.xlu0 %v1791, 95
        %v1795 = vpop.permute.xlu0 %1794
        %v1796 = vsel %vm365, %v1793, %v1795
        %v1799 = vadd.f32 %v1788, %v1796
        %v1800 = vadd.f32 %v1789, %v1795
        %v1801 = vrot.slane %v1694, 2
        %v1802 = vrot.slane %v1696, 2
        %1803 = vrot.lane.b32.xlu0 %v1801, 94
        %v1804 = vpop.permute.xlu0 %1803
        %1805 = vrot.lane.b32.xlu0 %v1802, 94
        %v1806 = vpop.permute.xlu0 %1805
        %v1807 = vsel %vm377, %v1804, %v1806
        %v1810 = vadd.f32 %v1799, %v1807
        %v1811 = vadd.f32 %v1800, %v1806
        %v1812 = vrot.slane %v1694, 3
        %v1813 = vrot.slane %v1696, 3
        %1814 = vrot.lane.b32.xlu0 %v1812, 93
        %v1815 = vpop.permute.xlu0 %1814
        %1816 = vrot.lane.b32.xlu0 %v1813, 93
        %v1817 = vpop.permute.xlu0 %1816
        %v1818 = vsel %vm389, %v1815, %v1817
        %v1821 = vadd.f32 %v1810, %v1818
        %v1822 = vadd.f32 %v1811, %v1817
        %v1823 = vrot.slane %v1694, 4
        %v1824 = vrot.slane %v1696, 4
        %1825 = vrot.lane.b32.xlu0 %v1823, 80
        %v1826 = vpop.permute.xlu0 %1825
        %1827 = vrot.lane.b32.xlu0 %v1824, 80
        %v1828 = vpop.permute.xlu0 %1827
        %v1829 = vsel %vm401, %v1826, %v1828
        %v1832 = vadd.f32 %v1821, %v1829
        %v1833 = vadd.f32 %v1822, %v1828
        %v1834 = vrot.slane %v1694, 5
        %v1835 = vrot.slane %v1696, 5
        %1836 = vrot.lane.b32.xlu0 %v1834, 79
        %v1837 = vpop.permute.xlu0 %1836
        %1838 = vrot.lane.b32.xlu0 %v1835, 79
        %v1839 = vpop.permute.xlu0 %1838
        %v1840 = vsel %vm413, %v1837, %v1839
        %v1843 = vadd.f32 %v1832, %v1840
        %v1844 = vadd.f32 %v1833, %v1839
        %v1845 = vrot.slane %v1694, 6
        %v1846 = vrot.slane %v1696, 6
        %1847 = vrot.lane.b32.xlu0 %v1845, 78
        %v1848 = vpop.permute.xlu0 %1847
        %1849 = vrot.lane.b32.xlu0 %v1846, 78
        %v1850 = vpop.permute.xlu0 %1849
        %v1851 = vsel %vm425, %v1848, %v1850
        %v1854 = vadd.f32 %v1843, %v1851
        %v1855 = vadd.f32 %v1844, %v1850
        %v1856 = vrot.slane %v1694, 7
        %v1857 = vrot.slane %v1696, 7
        %1858 = vrot.lane.b32.xlu0 %v1856, 77
        %v1859 = vpop.permute.xlu0 %1858
        %1860 = vrot.lane.b32.xlu0 %v1857, 77
        %v1861 = vpop.permute.xlu0 %1860
        %v1862 = vsel %vm437, %v1859, %v1861
        %v1865 = vadd.f32 %v1854, %v1862
        %v1866 = vadd.f32 %v1855, %v1861
        %v1867 = vmul.f32 %v1865, 0.001
        %v1868 = vmul.f32 %v1866, 0.001
        %v1871 = vcombine.low %v1867, %v1868
        %v1873 = vunpack.c.l.s4 1966171168
        %v1874 = vunpack.c.0.s8 %v1873
        %v1875 = vlaneseq
        %v1876 = vshrl.u32 %v1875, 7
        %v1877 = vsub.s32 %v1874, %v1876
        %v1878 = vrot.slane %v1871, %v1877
        %v1880 = vunpack.c.l.s4 1966171168
        %v1881 = vunpack.c.0.s8 %v1880
        %v1882 = vlaneseq
        %v1883 = vshrl.u32 %v1882, 7
        %v1884 = vsub.s32 %v1881, %v1883
        %v1885 = vrot.slane %v1878, %v1884
        %s1887 = scalar_lea.vmem %s162, 10 [#allocation5]
        %1888 = vst.msk [vmem:[%s1887] sm:$0x3] %vm466, %v1885
        %v1889 = vld [vmem:[%s0] sm:$0xff]
        %v1890 = vld [vmem:[%s0 + $0x8] sm:$0xff]
        %s1891 = scalar_lea.vmem %s142, 48 [#allocation2]
        %v1892 = vld [vmem:[%s1891] sm:$0xff]
        %v1894 = vcombine.high %v1892, %v1892
        %v1896 = vsel %vm170, %v1889, 0
        %v1899 = vsel %vm170, %v1890, 0
        %v1901 = vsel %vm177, %v1892, 0
        %v1903 = vsel %vm177, %v1894, 0
        %1905 = vmatprep.subr.mxu0 %v1903
        %1906 = vmatpush1.msra.mxu0 %v1901
        %1907 = vmatprep.subr.mxu0 0.0
        %1908 = vmatpush1.msra.mxu0 0.0
        %1909 = vmatprep.subr.mxu0 0.0
        %1910 = vmatpush1.msra.mxu0 0.0
        %1911 = vmatprep.subr.mxu0 0.0
        %1912 = vmatpush1.msra.mxu0 0.0
        %1913 = vmatprep.subr.mxu0 0.0
        %1914 = vmatpush1.msra.mxu0 0.0
        %1915 = vmatprep.subr.mxu0 0.0
        %1916 = vmatpush1.msra.mxu0 0.0
        %1917 = vmatprep.subr.mxu0 0.0
        %1918 = vmatpush1.msra.mxu0 0.0
        %1919 = vmatprep.subr.mxu0 0.0
        %1920 = vmatpush1.msra.mxu0 0.0
        %1921 = vmatprep.subr.mxu0 0.0
        %1922 = vmatpush1.msra.mxu0 0.0
        %1923 = vmatprep.subr.mxu0 0.0
        %1924 = vmatpush1.msra.mxu0 0.0
        %1925 = vmatprep.subr.mxu0 0.0
        %1926 = vmatpush1.msra.mxu0 0.0
        %1927 = vmatprep.subr.mxu0 0.0
        %1928 = vmatpush1.msra.mxu0 0.0
        %1929 = vmatprep.subr.mxu0 0.0
        %1930 = vmatpush1.msra.mxu0 0.0
        %1931 = vmatprep.subr.mxu0 0.0
        %1932 = vmatpush1.msra.mxu0 0.0
        %1933 = vmatprep.subr.mxu0 0.0
        %1934 = vmatpush1.msra.mxu0 0.0
        %1935 = vmatprep.subr.mxu0 0.0
        %1936 = vmatpush1.msra.mxu0 0.0
        %1937 = vmatprep.subr.mxu0 0.0
        %1938 = vmatpush1.msra.mxu0 0.0
        %1939 = vmatprep.subr.mxu0 0.0
        %1940 = vmatpush1.msra.mxu0 0.0
        %1941 = vmatprep.subr.mxu0 0.0
        %1942 = vmatpush1.msra.mxu0 0.0
        %1943 = vmatprep.subr.mxu0 0.0
        %1944 = vmatpush1.msra.mxu0 0.0
        %1945 = vmatprep.subr.mxu0 0.0
        %1946 = vmatpush1.msra.mxu0 0.0
        %1947 = vmatprep.subr.mxu0 0.0
        %1948 = vmatpush1.msra.mxu0 0.0
        %1949 = vmatprep.subr.mxu0 0.0
        %1950 = vmatpush1.msra.mxu0 0.0
        %1951 = vmatprep.subr.mxu0 0.0
        %1952 = vmatpush1.msra.mxu0 0.0
        %1953 = vmatprep.subr.mxu0 0.0
        %1954 = vmatpush1.msra.mxu0 0.0
        %1955 = vmatprep.subr.mxu0 0.0
        %1956 = vmatpush1.msra.mxu0 0.0
        %1957 = vmatprep.subr.mxu0 0.0
        %1958 = vmatpush1.msra.mxu0 0.0
        %1959 = vmatprep.subr.mxu0 0.0
        %1960 = vmatpush1.msra.mxu0 0.0
        %1961 = vmatprep.subr.mxu0 0.0
        %1962 = vmatpush1.msra.mxu0 0.0
        %1963 = vmatprep.subr.mxu0 0.0
        %1964 = vmatpush1.msra.mxu0 0.0
        %1965 = vmatprep.subr.mxu0 0.0
        %1966 = vmatpush1.msra.mxu0 0.0
        %1967 = vmatprep.subr.mxu0 0.0
        %1968 = vmatpush1.msra.mxu0 0.0
        %1969 = vmatprep.mubr.f32.mxu0 0.0
        %1970 = vmatmul.mubr.f32.gmra.mrb[0].mxu0 %v1896
        %v1971 = vpop.f32.mrb[0].mxu0
        %v1972 = vadd.f32 0.0, %v1971
        %v1973 = vpop.f32.mrb[0].mxu0
        %v1974 = vadd.f32 0.0, %v1973
        %1975 = vmatprep.mubr.f32.mxu0 0.0
        %1976 = vmatmul.mubr.f32.gmra.mrb[0].mxu0 %v1899
        %v1977 = vpop.f32.mrb[0].mxu0
        %v1978 = vadd.f32 0.0, %v1977
        %v1979 = vpop.f32.mrb[0].mxu0
        %v1980 = vadd.f32 0.0, %v1979
        %1981 = vdwg.mxu0
        %v1982 = vadd.f32 %v1972, 0.0
        %v1983 = vadd.f32 %v1974, 0.0
        %v1986 = vrot.slane %v1972, 1
        %v1987 = vrot.slane %v1974, 1
        %1988 = vrot.lane.b32.xlu0 %v1986, 127
        %v1989 = vpop.permute.xlu0 %1988
        %1990 = vrot.lane.b32.xlu0 %v1987, 127
        %v1991 = vpop.permute.xlu0 %1990
        %v1992 = vsel %vm269, %v1989, %v1991
        %v1995 = vadd.f32 %v1982, %v1992
        %v1996 = vadd.f32 %v1983, %v1991
        %v1997 = vrot.slane %v1972, 2
        %v1998 = vrot.slane %v1974, 2
        %1999 = vrot.lane.b32.xlu0 %v1997, 126
        %v2000 = vpop.permute.xlu0 %1999
        %2001 = vrot.lane.b32.xlu0 %v1998, 126
        %v2002 = vpop.permute.xlu0 %2001
        %v2003 = vsel %vm281, %v2000, %v2002
        %v2006 = vadd.f32 %v1995, %v2003
        %v2007 = vadd.f32 %v1996, %v2002
        %v2008 = vrot.slane %v1972, 3
        %v2009 = vrot.slane %v1974, 3
        %2010 = vrot.lane.b32.xlu0 %v2008, 125
        %v2011 = vpop.permute.xlu0 %2010
        %2012 = vrot.lane.b32.xlu0 %v2009, 125
        %v2013 = vpop.permute.xlu0 %2012
        %v2014 = vsel %vm293, %v2011, %v2013
        %v2017 = vadd.f32 %v2006, %v2014
        %v2018 = vadd.f32 %v2007, %v2013
        %v2019 = vrot.slane %v1972, 4
        %v2020 = vrot.slane %v1974, 4
        %2021 = vrot.lane.b32.xlu0 %v2019, 112
        %v2022 = vpop.permute.xlu0 %2021
        %2023 = vrot.lane.b32.xlu0 %v2020, 112
        %v2024 = vpop.permute.xlu0 %2023
        %v2025 = vsel %vm305, %v2022, %v2024
        %v2028 = vadd.f32 %v2017, %v2025
        %v2029 = vadd.f32 %v2018, %v2024
        %v2030 = vrot.slane %v1972, 5
        %v2031 = vrot.slane %v1974, 5
        %2032 = vrot.lane.b32.xlu0 %v2030, 111
        %v2033 = vpop.permute.xlu0 %2032
        %2034 = vrot.lane.b32.xlu0 %v2031, 111
        %v2035 = vpop.permute.xlu0 %2034
        %v2036 = vsel %vm317, %v2033, %v2035
        %v2039 = vadd.f32 %v2028, %v2036
        %v2040 = vadd.f32 %v2029, %v2035
        %v2041 = vrot.slane %v1972, 6
        %v2042 = vrot.slane %v1974, 6
        %2043 = vrot.lane.b32.xlu0 %v2041, 110
        %v2044 = vpop.permute.xlu0 %2043
        %2045 = vrot.lane.b32.xlu0 %v2042, 110
        %v2046 = vpop.permute.xlu0 %2045
        %v2047 = vsel %vm329, %v2044, %v2046
        %v2050 = vadd.f32 %v2039, %v2047
        %v2051 = vadd.f32 %v2040, %v2046
        %v2052 = vrot.slane %v1972, 7
        %v2053 = vrot.slane %v1974, 7
        %2054 = vrot.lane.b32.xlu0 %v2052, 109
        %v2055 = vpop.permute.xlu0 %2054
        %2056 = vrot.lane.b32.xlu0 %v2053, 109
        %v2057 = vpop.permute.xlu0 %2056
        %v2058 = vsel %vm341, %v2055, %v2057
        %v2061 = vadd.f32 %v2050, %v2058
        %v2062 = vadd.f32 %v2051, %v2057
        %2065 = vrot.lane.b32.xlu0 %v1978, 96
        %v2066 = vpop.permute.xlu0 %2065
        %2067 = vrot.lane.b32.xlu0 %v1980, 96
        %v2068 = vpop.permute.xlu0 %2067
        %v2069 = vsel %vm353, %v2066, %v2068
        %v2072 = vadd.f32 %v2061, %v2069
        %v2073 = vadd.f32 %v2062, %v2068
        %v2074 = vrot.slane %v1978, 1
        %v2075 = vrot.slane %v1980, 1
        %2076 = vrot.lane.b32.xlu0 %v2074, 95
        %v2077 = vpop.permute.xlu0 %2076
        %2078 = vrot.lane.b32.xlu0 %v2075, 95
        %v2079 = vpop.permute.xlu0 %2078
        %v2080 = vsel %vm365, %v2077, %v2079
        %v2083 = vadd.f32 %v2072, %v2080
        %v2084 = vadd.f32 %v2073, %v2079
        %v2085 = vrot.slane %v1978, 2
        %v2086 = vrot.slane %v1980, 2
        %2087 = vrot.lane.b32.xlu0 %v2085, 94
        %v2088 = vpop.permute.xlu0 %2087
        %2089 = vrot.lane.b32.xlu0 %v2086, 94
        %v2090 = vpop.permute.xlu0 %2089
        %v2091 = vsel %vm377, %v2088, %v2090
        %v2094 = vadd.f32 %v2083, %v2091
        %v2095 = vadd.f32 %v2084, %v2090
        %v2096 = vrot.slane %v1978, 3
        %v2097 = vrot.slane %v1980, 3
        %2098 = vrot.lane.b32.xlu0 %v2096, 93
        %v2099 = vpop.permute.xlu0 %2098
        %2100 = vrot.lane.b32.xlu0 %v2097, 93
        %v2101 = vpop.permute.xlu0 %2100
        %v2102 = vsel %vm389, %v2099, %v2101
        %v2105 = vadd.f32 %v2094, %v2102
        %v2106 = vadd.f32 %v2095, %v2101
        %v2107 = vrot.slane %v1978, 4
        %v2108 = vrot.slane %v1980, 4
        %2109 = vrot.lane.b32.xlu0 %v2107, 80
        %v2110 = vpop.permute.xlu0 %2109
        %2111 = vrot.lane.b32.xlu0 %v2108, 80
        %v2112 = vpop.permute.xlu0 %2111
        %v2113 = vsel %vm401, %v2110, %v2112
        %v2116 = vadd.f32 %v2105, %v2113
        %v2117 = vadd.f32 %v2106, %v2112
        %v2118 = vrot.slane %v1978, 5
        %v2119 = vrot.slane %v1980, 5
        %2120 = vrot.lane.b32.xlu0 %v2118, 79
        %v2121 = vpop.permute.xlu0 %2120
        %2122 = vrot.lane.b32.xlu0 %v2119, 79
        %v2123 = vpop.permute.xlu0 %2122
        %v2124 = vsel %vm413, %v2121, %v2123
        %v2127 = vadd.f32 %v2116, %v2124
        %v2128 = vadd.f32 %v2117, %v2123
        %v2129 = vrot.slane %v1978, 6
        %v2130 = vrot.slane %v1980, 6
        %2131 = vrot.lane.b32.xlu0 %v2129, 78
        %v2132 = vpop.permute.xlu0 %2131
        %2133 = vrot.lane.b32.xlu0 %v2130, 78
        %v2134 = vpop.permute.xlu0 %2133
        %v2135 = vsel %vm425, %v2132, %v2134
        %v2138 = vadd.f32 %v2127, %v2135
        %v2139 = vadd.f32 %v2128, %v2134
        %v2140 = vrot.slane %v1978, 7
        %v2141 = vrot.slane %v1980, 7
        %2142 = vrot.lane.b32.xlu0 %v2140, 77
        %v2143 = vpop.permute.xlu0 %2142
        %2144 = vrot.lane.b32.xlu0 %v2141, 77
        %v2145 = vpop.permute.xlu0 %2144
        %v2146 = vsel %vm437, %v2143, %v2145
        %v2149 = vadd.f32 %v2138, %v2146
        %v2150 = vadd.f32 %v2139, %v2145
        %v2151 = vmul.f32 %v2149, 0.001
        %v2152 = vmul.f32 %v2150, 0.001
        %v2155 = vcombine.low %v2151, %v2152
        %v2157 = vunpack.c.l.s4 1966171168
        %v2158 = vunpack.c.0.s8 %v2157
        %v2159 = vlaneseq
        %v2160 = vshrl.u32 %v2159, 7
        %v2161 = vsub.s32 %v2158, %v2160
        %v2162 = vrot.slane %v2155, %v2161
        %v2164 = vunpack.c.l.s4 1966171168
        %v2165 = vunpack.c.0.s8 %v2164
        %v2166 = vlaneseq
        %v2167 = vshrl.u32 %v2166, 7
        %v2168 = vsub.s32 %v2165, %v2167
        %v2169 = vrot.slane %v2162, %v2168
        %s2171 = scalar_lea.vmem %s162, 12 [#allocation5]
        %2172 = vst.msk [vmem:[%s2171] sm:$0x3] %vm466, %v2169
        %v2173 = vld [vmem:[%s468] sm:$0xff]
        %v2174 = vld [vmem:[%s468 + $0x8] sm:$0xff]
        %s2175 = scalar_lea.vmem %s142, 56 [#allocation2]
        %v2176 = vld [vmem:[%s2175] sm:$0xff]
        %v2178 = vcombine.high %v2176, %v2176
        %v2180 = vsel %vm170, %v2173, 0
        %v2183 = vsel %vm170, %v2174, 0
        %v2185 = vsel %vm177, %v2176, 0
        %v2187 = vsel %vm177, %v2178, 0
        %2189 = vmatprep.subr.mxu0 %v2187
        %2190 = vmatpush1.msra.mxu0 %v2185
        %2191 = vmatprep.subr.mxu0 0.0
        %2192 = vmatpush1.msra.mxu0 0.0
        %2193 = vmatprep.subr.mxu0 0.0
        %2194 = vmatpush1.msra.mxu0 0.0
        %2195 = vmatprep.subr.mxu0 0.0
        %2196 = vmatpush1.msra.mxu0 0.0
        %2197 = vmatprep.subr.mxu0 0.0
        %2198 = vmatpush1.msra.mxu0 0.0
        %2199 = vmatprep.subr.mxu0 0.0
        %2200 = vmatpush1.msra.mxu0 0.0
        %2201 = vmatprep.subr.mxu0 0.0
        %2202 = vmatpush1.msra.mxu0 0.0
        %2203 = vmatprep.subr.mxu0 0.0
        %2204 = vmatpush1.msra.mxu0 0.0
        %2205 = vmatprep.subr.mxu0 0.0
        %2206 = vmatpush1.msra.mxu0 0.0
        %2207 = vmatprep.subr.mxu0 0.0
        %2208 = vmatpush1.msra.mxu0 0.0
        %2209 = vmatprep.subr.mxu0 0.0
        %2210 = vmatpush1.msra.mxu0 0.0
        %2211 = vmatprep.subr.mxu0 0.0
        %2212 = vmatpush1.msra.mxu0 0.0
        %2213 = vmatprep.subr.mxu0 0.0
        %2214 = vmatpush1.msra.mxu0 0.0
        %2215 = vmatprep.subr.mxu0 0.0
        %2216 = vmatpush1.msra.mxu0 0.0
        %2217 = vmatprep.subr.mxu0 0.0
        %2218 = vmatpush1.msra.mxu0 0.0
        %2219 = vmatprep.subr.mxu0 0.0
        %2220 = vmatpush1.msra.mxu0 0.0
        %2221 = vmatprep.subr.mxu0 0.0
        %2222 = vmatpush1.msra.mxu0 0.0
        %2223 = vmatprep.subr.mxu0 0.0
        %2224 = vmatpush1.msra.mxu0 0.0
        %2225 = vmatprep.subr.mxu0 0.0
        %2226 = vmatpush1.msra.mxu0 0.0
        %2227 = vmatprep.subr.mxu0 0.0
        %2228 = vmatpush1.msra.mxu0 0.0
        %2229 = vmatprep.subr.mxu0 0.0
        %2230 = vmatpush1.msra.mxu0 0.0
        %2231 = vmatprep.subr.mxu0 0.0
        %2232 = vmatpush1.msra.mxu0 0.0
        %2233 = vmatprep.subr.mxu0 0.0
        %2234 = vmatpush1.msra.mxu0 0.0
        %2235 = vmatprep.subr.mxu0 0.0
        %2236 = vmatpush1.msra.mxu0 0.0
        %2237 = vmatprep.subr.mxu0 0.0
        %2238 = vmatpush1.msra.mxu0 0.0
        %2239 = vmatprep.subr.mxu0 0.0
        %2240 = vmatpush1.msra.mxu0 0.0
        %2241 = vmatprep.subr.mxu0 0.0
        %2242 = vmatpush1.msra.mxu0 0.0
        %2243 = vmatprep.subr.mxu0 0.0
        %2244 = vmatpush1.msra.mxu0 0.0
        %2245 = vmatprep.subr.mxu0 0.0
        %2246 = vmatpush1.msra.mxu0 0.0
        %2247 = vmatprep.subr.mxu0 0.0
        %2248 = vmatpush1.msra.mxu0 0.0
        %2249 = vmatprep.subr.mxu0 0.0
        %2250 = vmatpush1.msra.mxu0 0.0
        %2251 = vmatprep.subr.mxu0 0.0
        %2252 = vmatpush1.msra.mxu0 0.0
        %2253 = vmatprep.mubr.f32.mxu0 0.0
        %2254 = vmatmul.mubr.f32.gmra.mrb[0].mxu0 %v2180
        %v2255 = vpop.f32.mrb[0].mxu0
        %v2256 = vadd.f32 0.0, %v2255
        %v2257 = vpop.f32.mrb[0].mxu0
        %v2258 = vadd.f32 0.0, %v2257
        %2259 = vmatprep.mubr.f32.mxu0 0.0
        %2260 = vmatmul.mubr.f32.gmra.mrb[0].mxu0 %v2183
        %v2261 = vpop.f32.mrb[0].mxu0
        %v2262 = vadd.f32 0.0, %v2261
        %v2263 = vpop.f32.mrb[0].mxu0
        %v2264 = vadd.f32 0.0, %v2263
        %2265 = vdwg.mxu0
        %v2266 = vadd.f32 %v2256, 0.0
        %v2267 = vadd.f32 %v2258, 0.0
        %v2270 = vrot.slane %v2256, 1
        %v2271 = vrot.slane %v2258, 1
        %2272 = vrot.lane.b32.xlu0 %v2270, 127
        %v2273 = vpop.permute.xlu0 %2272
        %2274 = vrot.lane.b32.xlu0 %v2271, 127
        %v2275 = vpop.permute.xlu0 %2274
        %v2276 = vsel %vm269, %v2273, %v2275
        %v2279 = vadd.f32 %v2266, %v2276
        %v2280 = vadd.f32 %v2267, %v2275
        %v2281 = vrot.slane %v2256, 2
        %v2282 = vrot.slane %v2258, 2
        %2283 = vrot.lane.b32.xlu0 %v2281, 126
        %v2284 = vpop.permute.xlu0 %2283
        %2285 = vrot.lane.b32.xlu0 %v2282, 126
        %v2286 = vpop.permute.xlu0 %2285
        %v2287 = vsel %vm281, %v2284, %v2286
        %v2290 = vadd.f32 %v2279, %v2287
        %v2291 = vadd.f32 %v2280, %v2286
        %v2292 = vrot.slane %v2256, 3
        %v2293 = vrot.slane %v2258, 3
        %2294 = vrot.lane.b32.xlu0 %v2292, 125
        %v2295 = vpop.permute.xlu0 %2294
        %2296 = vrot.lane.b32.xlu0 %v2293, 125
        %v2297 = vpop.permute.xlu0 %2296
        %v2298 = vsel %vm293, %v2295, %v2297
        %v2301 = vadd.f32 %v2290, %v2298
        %v2302 = vadd.f32 %v2291, %v2297
        %v2303 = vrot.slane %v2256, 4
        %v2304 = vrot.slane %v2258, 4
        %2305 = vrot.lane.b32.xlu0 %v2303, 112
        %v2306 = vpop.permute.xlu0 %2305
        %2307 = vrot.lane.b32.xlu0 %v2304, 112
        %v2308 = vpop.permute.xlu0 %2307
        %v2309 = vsel %vm305, %v2306, %v2308
        %v2312 = vadd.f32 %v2301, %v2309
        %v2313 = vadd.f32 %v2302, %v2308
        %v2314 = vrot.slane %v2256, 5
        %v2315 = vrot.slane %v2258, 5
        %2316 = vrot.lane.b32.xlu0 %v2314, 111
        %v2317 = vpop.permute.xlu0 %2316
        %2318 = vrot.lane.b32.xlu0 %v2315, 111
        %v2319 = vpop.permute.xlu0 %2318
        %v2320 = vsel %vm317, %v2317, %v2319
        %v2323 = vadd.f32 %v2312, %v2320
        %v2324 = vadd.f32 %v2313, %v2319
        %v2325 = vrot.slane %v2256, 6
        %v2326 = vrot.slane %v2258, 6
        %2327 = vrot.lane.b32.xlu0 %v2325, 110
        %v2328 = vpop.permute.xlu0 %2327
        %2329 = vrot.lane.b32.xlu0 %v2326, 110
        %v2330 = vpop.permute.xlu0 %2329
        %v2331 = vsel %vm329, %v2328, %v2330
        %v2334 = vadd.f32 %v2323, %v2331
        %v2335 = vadd.f32 %v2324, %v2330
        %v2336 = vrot.slane %v2256, 7
        %v2337 = vrot.slane %v2258, 7
        %2338 = vrot.lane.b32.xlu0 %v2336, 109
        %v2339 = vpop.permute.xlu0 %2338
        %2340 = vrot.lane.b32.xlu0 %v2337, 109
        %v2341 = vpop.permute.xlu0 %2340
        %v2342 = vsel %vm341, %v2339, %v2341
        %v2345 = vadd.f32 %v2334, %v2342
        %v2346 = vadd.f32 %v2335, %v2341
        %2349 = vrot.lane.b32.xlu0 %v2262, 96
        %v2350 = vpop.permute.xlu0 %2349
        %2351 = vrot.lane.b32.xlu0 %v2264, 96
        %v2352 = vpop.permute.xlu0 %2351
        %v2353 = vsel %vm353, %v2350, %v2352
        %v2356 = vadd.f32 %v2345, %v2353
        %v2357 = vadd.f32 %v2346, %v2352
        %v2358 = vrot.slane %v2262, 1
        %v2359 = vrot.slane %v2264, 1
        %2360 = vrot.lane.b32.xlu0 %v2358, 95
        %v2361 = vpop.permute.xlu0 %2360
        %2362 = vrot.lane.b32.xlu0 %v2359, 95
        %v2363 = vpop.permute.xlu0 %2362
        %v2364 = vsel %vm365, %v2361, %v2363
        %v2367 = vadd.f32 %v2356, %v2364
        %v2368 = vadd.f32 %v2357, %v2363
        %v2369 = vrot.slane %v2262, 2
        %v2370 = vrot.slane %v2264, 2
        %2371 = vrot.lane.b32.xlu0 %v2369, 94
        %v2372 = vpop.permute.xlu0 %2371
        %2373 = vrot.lane.b32.xlu0 %v2370, 94
        %v2374 = vpop.permute.xlu0 %2373
        %v2375 = vsel %vm377, %v2372, %v2374
        %v2378 = vadd.f32 %v2367, %v2375
        %v2379 = vadd.f32 %v2368, %v2374
        %v2380 = vrot.slane %v2262, 3
        %v2381 = vrot.slane %v2264, 3
        %2382 = vrot.lane.b32.xlu0 %v2380, 93
        %v2383 = vpop.permute.xlu0 %2382
        %2384 = vrot.lane.b32.xlu0 %v2381, 93
        %v2385 = vpop.permute.xlu0 %2384
        %v2386 = vsel %vm389, %v2383, %v2385
        %v2389 = vadd.f32 %v2378, %v2386
        %v2390 = vadd.f32 %v2379, %v2385
        %v2391 = vrot.slane %v2262, 4
        %v2392 = vrot.slane %v2264, 4
        %2393 = vrot.lane.b32.xlu0 %v2391, 80
        %v2394 = vpop.permute.xlu0 %2393
        %2395 = vrot.lane.b32.xlu0 %v2392, 80
        %v2396 = vpop.permute.xlu0 %2395
        %v2397 = vsel %vm401, %v2394, %v2396
        %v2400 = vadd.f32 %v2389, %v2397
        %v2401 = vadd.f32 %v2390, %v2396
        %v2402 = vrot.slane %v2262, 5
        %v2403 = vrot.slane %v2264, 5
        %2404 = vrot.lane.b32.xlu0 %v2402, 79
        %v2405 = vpop.permute.xlu0 %2404
        %2406 = vrot.lane.b32.xlu0 %v2403, 79
        %v2407 = vpop.permute.xlu0 %2406
        %v2408 = vsel %vm413, %v2405, %v2407
        %v2411 = vadd.f32 %v2400, %v2408
        %v2412 = vadd.f32 %v2401, %v2407
        %v2413 = vrot.slane %v2262, 6
        %v2414 = vrot.slane %v2264, 6
        %2415 = vrot.lane.b32.xlu0 %v2413, 78
        %v2416 = vpop.permute.xlu0 %2415
        %2417 = vrot.lane.b32.xlu0 %v2414, 78
        %v2418 = vpop.permute.xlu0 %2417
        %v2419 = vsel %vm425, %v2416, %v2418
        %v2422 = vadd.f32 %v2411, %v2419
        %v2423 = vadd.f32 %v2412, %v2418
        %v2424 = vrot.slane %v2262, 7
        %v2425 = vrot.slane %v2264, 7
        %2426 = vrot.lane.b32.xlu0 %v2424, 77
        %v2427 = vpop.permute.xlu0 %2426
        %2428 = vrot.lane.b32.xlu0 %v2425, 77
        %v2429 = vpop.permute.xlu0 %2428
        %v2430 = vsel %vm437, %v2427, %v2429
        %v2433 = vadd.f32 %v2422, %v2430
        %v2434 = vadd.f32 %v2423, %v2429
        %v2435 = vmul.f32 %v2433, 0.001
        %v2436 = vmul.f32 %v2434, 0.001
        %v2439 = vcombine.low %v2435, %v2436
        %v2441 = vunpack.c.l.s4 1966171168
        %v2442 = vunpack.c.0.s8 %v2441
        %v2443 = vlaneseq
        %v2444 = vshrl.u32 %v2443, 7
        %v2445 = vsub.s32 %v2442, %v2444
        %v2446 = vrot.slane %v2439, %v2445
        %v2448 = vunpack.c.l.s4 1966171168
        %v2449 = vunpack.c.0.s8 %v2448
        %v2450 = vlaneseq
        %v2451 = vshrl.u32 %v2450, 7
        %v2452 = vsub.s32 %v2449, %v2451
        %v2453 = vrot.slane %v2446, %v2452
        %s2455 = scalar_lea.vmem %s162, 14 [#allocation5]
        %2456 = vst.msk [vmem:[%s2455] sm:$0x3] %vm466, %v2453
        %s2457 = sand.u32 %s74, 1
        %s2458 = scalar_lea.sflag [#allocation4], %s2457
        %s2459 = sand.u32 %s74, 1
        %s2460 = smul.addr %s2459, 16
        %s2461 = scalar_lea.vmem [#allocation5], %s2460
        // Predicated region
        $region33: #{tpu_custom_call.1} parent=27 // pred_check
          %p2462 = pneg %p84
        $region34: #{tpu_custom_call.1} parent=27 // pred_check_branch
          %2464 = sbr.rel (%p2462) target = $region36
        $region35: #{tpu_custom_call.1} parent=27 // pred_region
          %s2465 = smul.u32 8, %s19
          %s2467 = ssub.s32 256, 256
          %2468 = vsyncadd %s2458, %s2467
          %s2469 = smul.addr %s2465, 2
          %s2470 = smul.addr %s2469, 16
          %s2471 = scalar_lea.hbm %s2, %s2470
          %s2472 = sshll.u32 %s2461, 4
          %s2473 = int_to_ptr.vmem [resolvable:$true] %s2472
          %2478 = dma.vmem_to_hbm [thread:$0]  %s2473, 256, %s2471, %s2458, 32, 32, 2
        $region36: #{tpu_custom_call.1} parent=27 // pred_fallthru
          _
      $region28: #{tpu_custom_call.1} parent=5 // pred_fallthru
        _
      %p2479 = scmp.le.s32.totalorder 2, %s14
      // Predicated region
      $region37: #{tpu_custom_call.1} parent=5 // pred_check
        %p2480 = pneg %p2479
      $region38: #{tpu_custom_call.1} parent=5 // pred_check_branch
        %2482 = sbr.rel (%p2480) target = $region40
      $region39: #{tpu_custom_call.1} parent=5 // pred_region
        %s2483 = ssub.s32 %s14, 2
        // Predicated region
        $region41: #{tpu_custom_call.1} parent=39 // pred_check
          %p2484 = pneg %p90
        $region42: #{tpu_custom_call.1} parent=39 // pred_check_branch
          %2486 = sbr.rel (%p2484) target = $region44
        $region43: #{tpu_custom_call.1} parent=39 // pred_region
          %s2487 = sand.u32 %s75, 1
          %s2488 = scalar_lea.sflag [#allocation4], %s2487
          %s2489 = sand.u32 %s75, 1
          %s2490 = smul.addr %s2489, 16
          %s2491 = scalar_lea.vmem [#allocation5], %s2490
          %2492 = dma.done %s2488, 256
        $region44: #{tpu_custom_call.1} parent=39 // pred_fallthru
          _
      $region40: #{tpu_custom_call.1} parent=5 // pred_fallthru
        _
    $region6: #{tpu_custom_call.1} parent=1 // loop_footer
      %s18 = sadd.s32 1, %s14
    $region7: #{tpu_custom_call.1} parent=1 // loop_footer_branch
      %13 = sbr.rel target = $region3
    $region8: #{tpu_custom_call.1} parent=1 // loop_exit
      _
    %2493 = vsyncpa [#allocation3], 1
    %s2494 = scalar_lea.sflag [#allocation3], 1
    %2495 = vsyncpa %s2494, 1
    %2496 = vsyncpa [#allocation4], 1
    %s2497 = scalar_lea.sflag [#allocation4], 1
    %2498 = vsyncpa %s2497, 1

</llo_original>
